<compile_context>
chip_gen: v5e
topology: v5e:2x2
jax: 0.10.0
libtpu: 0.0.40
codegen_flags: <defaults>
</compile_context>

<pallas_src>
import functools
import math

import jax
import jax.numpy as jnp
from jax import lax
from jax.experimental import pallas as pl
from jax.experimental.pallas import tpu as pltpu

LN2 = math.log(2.0)
LANE = 128


def _ssp(x):
    # shifted_softplus(x) = softplus(x) - log(2), numerically stable
    return jnp.maximum(x, 0.0) + jnp.log1p(jnp.exp(-jnp.abs(x))) - LN2


def _round_up(v, m):
    return (v + m - 1) // m * m


# ----------------------- kernel A: edge accumulation --------------------------
def _edge_kernel(fcat_ref, xj_ref, idx_i_ref,
                 w1_ref, b1_ref, w2_ref, b2_ref,
                 convx_ref, *, compute_dtype):
    """One edge tile: continuous filter + x_ij + scatter_add into conv_x."""
    e = pl.program_id(1)
    n_pad = convx_ref.shape[0]
    te = fcat_ref.shape[0]

    @pl.when(e == 0)
    def _init():
        convx_ref[...] = jnp.zeros_like(convx_ref)

    # Continuous filter.  The fused network (if any) was merged into w1/w2 by
    # the wrapper (block-diagonal layer 1, stacked layer 2), so layer 2
    # contracts over 2*F_pad lanes in fused mode.
    h1 = _ssp(jnp.dot(fcat_ref[...], w1_ref[...],
                      preferred_element_type=jnp.float32) + b1_ref[...])
    wij = jnp.dot(h1.astype(compute_dtype), w2_ref[...],
                  preferred_element_type=jnp.float32) + b2_ref[...]

    # x_ij = x_j * Wij  (rcut_ij already folded into x_j by the wrapper).
    x_ij = (xj_ref[...].astype(jnp.float32) * wij).astype(compute_dtype)

    # scatter_add over idx_i as a (N, TE) one-hot MXU segment-sum, f32 accum.
    # Padded edges carry idx_i == -1 (and x_j == 0) -> zero contribution.
    # TODO(synk): with edges pre-sorted by idx_i this becomes a per-tile
    # segment-sum + dynamic row update, dropping the remaining O(TE*N*F)
    # multiply-by-zero work.
    oh = (idx_i_ref[...] ==
          lax.broadcasted_iota(jnp.int32, (n_pad, te), 0)).astype(compute_dtype)
    convx_ref[...] += jnp.dot(oh, x_ij, preferred_element_type=jnp.float32)


# ----------------------- kernel B: combine partials + f2out -------------------
def _f2out_kernel(part_ref, wo1_ref, bo1_ref, wo2_ref, bo2_ref, out_ref, *,
                  compute_dtype):
    conv = part_ref[0]
    for c in range(1, part_ref.shape[0]):          # static, tiny (num splits)
        conv = conv + part_ref[c]
    y1 = _ssp(jnp.dot(conv.astype(compute_dtype), wo1_ref[...],
                      preferred_element_type=jnp.float32) + bo1_ref[...])
    out_ref[...] = (jnp.dot(y1.astype(compute_dtype), wo2_ref[...],
                            preferred_element_type=jnp.float32)
                    + bo2_ref[...]).astype(out_ref.dtype)


# ------------------------------ wrapper helpers --------------------------------
def _pad2d(a, rows, cols, dtype=jnp.float32):
    a = jnp.asarray(a, jnp.float32)
    return jnp.pad(a, ((0, rows - a.shape[0]), (0, cols - a.shape[1]))).astype(dtype)


def _auto_vmem_limit():
    """Generation-aware VMEM budget (~96 MiB on 128-MiB chips, ~40 MiB on v7x)."""
    cap = 128 * 1024 * 1024
    try:
        cap = int(pltpu.get_tpu_info().vmem_capacity_bytes)
    except Exception:
        pass
    return max(32 * 1024 * 1024, min(cap - 24 * 1024 * 1024, 96 * 1024 * 1024))


def _default_core_splits():
    """Two partial accumulators on 2-TensorCore chips (v7x), else one."""
    try:
        if "v7" in jax.devices()[0].device_kind.lower():
            return 2
    except Exception:
        pass
    return 1


def _pick_edge_tile(e_per_core, n_pad, f_pad, r_tot, f_hid, csize, vmem_limit):
    """Largest edge tile (multiple of 128, <= 4096) whose working set fits."""
    resident = (2 * n_pad * f_pad * 4                          # conv_x out block
                + 2 * (r_tot * f_hid + f_hid * f_pad) * csize  # W1, W2 (2 bufs)
                + 2 * (f_hid + f_pad) * 4)                     # biases
    per_edge = (2 * (r_tot + f_pad) * csize + 2 * 4            # 2x-buffered tiles
                + (f_hid + f_pad) * 4                          # hidden + Wij f32
                + f_pad * csize                                # x_ij
                + n_pad * csize)                               # one-hot column
    budget = (vmem_limit * 3) // 4 - resident                  # spill headroom
    te = budget // max(per_edge, 1)
    te = max(128, min(4096, (te // 128) * 128))
    return int(min(te, _round_up(max(e_per_core, 1), 128)))


# ---------------------------------- forward ------------------------------------
def pbgnn_interaction(x, f_ij, idx_i, idx_j, rcut_ij, params, co_ij=None, *,
                      edge_tile=None, num_core_splits=None, precision="bf16",
                      vmem_limit_bytes=None):
    """Pallas LargeScalePBGNNInteraction forward.  co_ij != None <=> fused block.

    precision: "bf16" (default; bf16 MXU operands, f32 accumulation) or "fp32".
    """
    fused = co_ij is not None
    N, A = x.shape
    E, R = f_ij.shape
    F = params["w_in2f"].shape[1]

    cdt = jnp.float32 if precision == "fp32" else jnp.bfloat16
    csize = jnp.dtype(cdt).itemsize

    F_pad = _round_up(F, LANE)
    A_pad = _round_up(A, LANE)
    TN = min(256, _round_up(N, 8))            # node tile for kernel B
    N_pad = _round_up(N, TN)
    NC = int(num_core_splits) if num_core_splits else _default_core_splits()

    # -------- pack the (optionally fused) filter network into one MLP --------
    if fused:
        Rk = co_ij.shape[1]
        Rt, Fh = R + Rk, 2 * F_pad
        w1 = jnp.zeros((Rt, Fh), jnp.float32)
        w1 = w1.at[:R, :F].set(jnp.asarray(params["wf1"], jnp.float32))
        w1 = w1.at[R:, F_pad:F_pad + F].set(jnp.asarray(params["wfu1"], jnp.float32))
        b1 = jnp.zeros((1, Fh), jnp.float32)
        b1 = b1.at[:, :F].set(jnp.asarray(params["bf1"], jnp.float32))
        b1 = b1.at[:, F_pad:F_pad + F].set(jnp.asarray(params["bfu1"], jnp.float32))
        w2 = jnp.zeros((Fh, F_pad), jnp.float32)
        w2 = w2.at[:F, :F].set(jnp.asarray(params["wf2"], jnp.float32))
        w2 = w2.at[F_pad:F_pad + F, :F].set(jnp.asarray(params["wfu2"], jnp.float32))
        b2 = jnp.zeros((1, F_pad), jnp.float32)
        b2 = b2.at[:, :F].set(jnp.asarray(params["bf2"] + params["bfu2"], jnp.float32))
        f_cat = jnp.concatenate([jnp.asarray(f_ij, jnp.float32),
                                 jnp.asarray(co_ij, jnp.float32)], axis=1)
    else:
        Rt, Fh = R, F_pad
        w1 = _pad2d(params["wf1"], R, F_pad)
        b1 = _pad2d(params["bf1"], 1, F_pad)
        w2 = _pad2d(params["wf2"], F_pad, F_pad)
        b2 = _pad2d(params["bf2"], 1, F_pad)
        f_cat = jnp.asarray(f_ij, jnp.float32)

    # -------- hoisted to XLA: in2f and the neighbor gather (+ rcut fold) ------
    h = jnp.dot(jnp.asarray(x, jnp.float32),
                jnp.asarray(params["w_in2f"], jnp.float32),
                precision=lax.Precision.HIGHEST)                       # (N, F)
    x_j = h[jnp.asarray(idx_j, jnp.int32)] * jnp.asarray(rcut_ij, jnp.float32)[:, None]

    # -------- edge tiling / padding -------------------------------------------
    vmem_limit = int(vmem_limit_bytes) if vmem_limit_bytes else _auto_vmem_limit()
    e_per_core = -(-E // NC)
    if edge_tile is None:
        TE = _pick_edge_tile(e_per_core, N_pad, F_pad, Rt, Fh, csize, vmem_limit)
    else:
        TE = max(128, (min(int(edge_tile), _round_up(e_per_core, 128)) // 128) * 128)
    tiles_per_core = -(-e_per_core // TE)
    E_pad = NC * tiles_per_core * TE
    pad_e = E_pad - E

    f_cat_p = jnp.pad(f_cat, ((0, pad_e), (0, 0))).astype(cdt)
    x_j_p = jnp.pad(x_j, ((0, pad_e), (0, F_pad - F))).astype(cdt)
    idx_i_p = jnp.pad(jnp.asarray(idx_i, jnp.int32), (0, pad_e),
                      constant_values=-1).reshape(1, E_pad)

    w1_c, w2_c = w1.astype(cdt), w2.astype(cdt)

    def e_map(c, e):
        return (c * tiles_per_core + e, 0)

    def i_map(c, e):
        return (0, c * tiles_per_core + e)

    def res_map(c, e):
        return (0, 0)

    # TODO(synk): pipeline_mode=pl.Buffered(1) on the resident weight blocks
    # would halve their VMEM residency; left off pending end-to-end support.
    conv_parts = pl.pallas_call(
        functools.partial(_edge_kernel, compute_dtype=cdt),
        out_shape=jax.ShapeDtypeStruct((NC, N_pad, F_pad), jnp.float32),
        grid=(NC, tiles_per_core),
        in_specs=[
            pl.BlockSpec((TE, Rt), e_map),          # edge features f_ij [+ co_ij]
            pl.BlockSpec((TE, F_pad), e_map),       # gathered x_j * rcut
            pl.BlockSpec((1, TE), i_map),           # idx_i
            pl.BlockSpec((Rt, Fh), res_map),        # packed filter layer 1
            pl.BlockSpec((1, Fh), res_map),
            pl.BlockSpec((Fh, F_pad), res_map),     # packed filter layer 2
            pl.BlockSpec((1, F_pad), res_map),
        ],
        out_specs=pl.BlockSpec((None, N_pad, F_pad), lambda c, e: (c, 0, 0)),
        compiler_params=pltpu.CompilerParams(
            dimension_semantics=("parallel", "arbitrary"),
            vmem_limit_bytes=vmem_limit),
    )(f_cat_p, x_j_p, idx_i_p, w1_c, b1, w2_c, b2)

    # -------- combine per-core partials + f2out (node-tiled) ------------------
    wo1 = _pad2d(params["wo1"], F_pad, A_pad, cdt)
    bo1 = _pad2d(params["bo1"], 1, A_pad)
    wo2 = _pad2d(params["wo2"], A_pad, A_pad, cdt)
    bo2 = _pad2d(params["bo2"], 1, A_pad)

    out = pl.pallas_call(
        functools.partial(_f2out_kernel, compute_dtype=cdt),
        out_shape=jax.ShapeDtypeStruct((N_pad, A_pad), jnp.float32),
        grid=(N_pad // TN,),
        in_specs=[
            pl.BlockSpec((NC, TN, F_pad), lambda i: (0, i, 0)),
            pl.BlockSpec((F_pad, A_pad), lambda i: (0, 0)),
            pl.BlockSpec((1, A_pad), lambda i: (0, 0)),
            pl.BlockSpec((A_pad, A_pad), lambda i: (0, 0)),
            pl.BlockSpec((1, A_pad), lambda i: (0, 0)),
        ],
        out_specs=pl.BlockSpec((TN, A_pad), lambda i: (i, 0)),
        compiler_params=pltpu.CompilerParams(
            dimension_semantics=("parallel",),
            vmem_limit_bytes=vmem_limit),
    )(conv_parts, wo1, bo1, wo2, bo2)

    # TODO(synk): no node-tiling fallback yet — conv_x requires (N, F_pad)
    # resident in VMEM per core, which bounds N per TensorCore.
    return out[:N, :A]


# ---------------- deterministic parameter init (synthetic; no checkpoints) ----
def _glorot(key, fan_in, fan_out):
    lim = math.sqrt(6.0 / (fan_in + fan_out))
    return jax.random.uniform(key, (fan_in, fan_out), jnp.float32, -lim, lim)


def init_params(key, n_atom_basis, n_rbf, n_filters,
                fused=False, fused_feature_num=1):
    ks = jax.random.split(key, 8)
    p = {
        "w_in2f": _glorot(ks[0], n_atom_basis, n_filters),
        "wf1": _glorot(ks[1], n_rbf, n_filters),
        "bf1": jnp.zeros((1, n_filters), jnp.float32),
        "wf2": _glorot(ks[2], n_filters, n_filters),
        "bf2": jnp.zeros((1, n_filters), jnp.float32),
        "wo1": _glorot(ks[3], n_filters, n_atom_basis),
        "bo1": jnp.zeros((1, n_atom_basis), jnp.float32),
        "wo2": _glorot(ks[4], n_atom_basis, n_atom_basis),
        "bo2": jnp.zeros((1, n_atom_basis), jnp.float32),
    }
    if fused:
        p["wfu1"] = _glorot(ks[5], n_rbf * fused_feature_num, n_filters)
        p["bfu1"] = jnp.zeros((1, n_filters), jnp.float32)
        p["wfu2"] = _glorot(ks[6], n_filters, n_filters)
        p["bfu2"] = jnp.zeros((1, n_filters), jnp.float32)
    return p


# ---------------- pure-JAX reference (mirrors the PyTorch forward) ------------
def reference(x, f_ij, idx_i, idx_j, rcut_ij, params, co_ij=None):
    h = x @ params["w_in2f"]
    w1 = _ssp(f_ij @ params["wf1"] + params["bf1"])
    Wij = w1 @ params["wf2"] + params["bf2"]
    Wij = Wij * rcut_ij[:, None]
    if co_ij is not None:
        fu = _ssp(co_ij @ params["wfu1"] + params["bfu1"]) @ params["wfu2"] + params["bfu2"]
        Wij = Wij + fu * rcut_ij[:, None]
    x_j = h[idx_j]
    x_ij = x_j * Wij
    conv_x = jnp.zeros_like(h).at[idx_i].add(x_ij)
    y1 = _ssp(conv_x @ params["wo1"] + params["bo1"])
    return y1 @ params["wo2"] + params["bo2"]


if __name__ == "__main__":
    # Use true f32 matmuls for the XLA-side reference / wrapper ops so the
    # "fp32" kernel precision mode can be checked against a faithful reference.
    jax.config.update("jax_default_matmul_precision", "float32")

    # small shapes: 16 atoms, 200 edges (non-multiple of tile -> exercises
    # padding + multi-tile accumulation), n_atom_basis=32, n_rbf=16, n_filters=32
    N, E = 16, 200
    n_atom_basis, n_rbf, n_filters = 32, 16, 32
    fused_feature_num = 2

    key = jax.random.PRNGKey(0)
    kx, kf, kc, ki, kj, kr, kp = jax.random.split(key, 7)

    x = jax.random.normal(kx, (N, n_atom_basis), jnp.float32)
    f_ij = jax.random.normal(kf, (E, n_rbf), jnp.float32)
    co_ij = jax.random.normal(kc, (E, n_rbf * fused_feature_num), jnp.float32)
    idx_i = jax.random.randint(ki, (E,), 0, N, jnp.int32)
    idx_j = jax.random.randint(kj, (E,), 0, N, jnp.int32)
    rcut_ij = jax.random.uniform(kr, (E,), jnp.float32)

    params = init_params(kp, n_atom_basis, n_rbf, n_filters,
                         fused=True, fused_feature_num=fused_feature_num)

    configs = [
        # non-fused block, fp32 compute, single core split, explicit 2-tile edge loop
        dict(use_fused=False, precision="fp32", num_core_splits=1,
             edge_tile=128, atol=2e-2, rel=1e-2),
        # fused block, bf16 compute, 2 core splits (exercises partial-accumulator
        # combine; runs serially on 1-TensorCore chips), auto edge tile
        dict(use_fused=True, precision="bf16", num_core_splits=2,
             edge_tile=None, atol=8e-2, rel=4e-2),
    ]
    for cfg in configs:
        co = co_ij if cfg["use_fused"] else None
        out = pbgnn_interaction(x, f_ij, idx_i, idx_j, rcut_ij, params, co_ij=co,
                                edge_tile=cfg["edge_tile"],
                                num_core_splits=cfg["num_core_splits"],
                                precision=cfg["precision"])
        out = jax.block_until_ready(out)
        ref = reference(x, f_ij, idx_i, idx_j, rcut_ij, params, co_ij=co)
        assert out.shape == (N, n_atom_basis)
        rel = jnp.linalg.norm(out - ref) / (jnp.linalg.norm(ref) + 1e-12)
        assert jnp.allclose(out, ref, atol=cfg["atol"], rtol=cfg["atol"]), \
            float(jnp.abs(out - ref).max())
        assert float(rel) < cfg["rel"], float(rel)

    print("KERNEL_OK")
</pallas_src>

<mosaic_0001>
module attributes {stable_mosaic.version = 11 : i64} {
  func.func @_edge_kernel(%arg0: i32, %arg1: i32, %arg2: memref<128x16xf32, #tpu.memory_space<vmem>>, %arg3: memref<128x128xf32, #tpu.memory_space<vmem>>, %arg4: memref<1x128xi32, #tpu.memory_space<vmem>>, %arg5: memref<16x128xf32, #tpu.memory_space<vmem>>, %arg6: memref<1x128xf32, #tpu.memory_space<vmem>>, %arg7: memref<128x128xf32, #tpu.memory_space<vmem>>, %arg8: memref<1x128xf32, #tpu.memory_space<vmem>>, %arg9: memref<1x16x128xf32, #tpu.memory_space<vmem>>) attributes {dimension_semantics = [#tpu.dimension_semantics<parallel>, #tpu.dimension_semantics<arbitrary>], iteration_bounds = array<i64: 1, 2>, scalar_prefetch = 0 : i64, scratch_operands = 0 : i64, tpu.core_type = #tpu.core_type<tc>, window_params = [{transform_indices = @transform_0, window_bounds = array<i64: 128, 16>}, {transform_indices = @transform_1, window_bounds = array<i64: 128, 128>}, {transform_indices = @transform_2, window_bounds = array<i64: 1, 128>}, {pipeline_mode = #tpu.pipeline_mode<synchronous>, transform_indices = @transform_3, window_bounds = array<i64: 16, 128>}, {pipeline_mode = #tpu.pipeline_mode<synchronous>, transform_indices = @transform_4, window_bounds = array<i64: 1, 128>}, {pipeline_mode = #tpu.pipeline_mode<synchronous>, transform_indices = @transform_5, window_bounds = array<i64: 128, 128>}, {pipeline_mode = #tpu.pipeline_mode<synchronous>, transform_indices = @transform_6, window_bounds = array<i64: 1, 128>}, {transform_indices = @transform_7, window_bounds = array<i64: 1, 16, 128>}]} {
    %c0_i32 = arith.constant 0 : i32
    %0 = arith.cmpi eq, %arg1, %c0_i32 : i32
    %1 = arith.extui %0 : i1 to i32
    %c0_i32_0 = arith.constant 0 : i32
    %2 = arith.cmpi ne, %1, %c0_i32_0 : i32
    scf.if %2 {
      %cst_25 = arith.constant 0.000000e+00 : f32
      %39 = vector.broadcast %cst_25 : f32 to vector<16x128xf32>
      %c0_26 = arith.constant 0 : index
      %c0_27 = arith.constant 0 : index
      %c0_28 = arith.constant 0 : index
      %40 = vector.load %arg9[%c0_26, %c0_27, %c0_28] : memref<1x16x128xf32, #tpu.memory_space<vmem>>, vector<1x16x128xf32>
      %41 = vector.shape_cast %40 : vector<1x16x128xf32> to vector<16x128xf32>
      %42 = vector.shape_cast %39 : vector<16x128xf32> to vector<1x16x128xf32>
      tpu.vector_store %arg9[%c0_26, %c0_27, %c0_28], %42 {strides = array<i32>} : memref<1x16x128xf32, #tpu.memory_space<vmem>>, vector<1x16x128xf32>,
    } else {
    }
    %c0 = arith.constant 0 : index
    %c0_1 = arith.constant 0 : index
    %3 = vector.load %arg2[%c0, %c0_1] : memref<128x16xf32, #tpu.memory_space<vmem>>, vector<128x16xf32>
    %c0_2 = arith.constant 0 : index
    %c0_3 = arith.constant 0 : index
    %4 = vector.load %arg5[%c0_2, %c0_3] : memref<16x128xf32, #tpu.memory_space<vmem>>, vector<16x128xf32>
    %cst = arith.constant dense<0.000000e+00> : vector<128x128xf32>
    %5 = tpu.matmul %3, %4, %cst {dimension_numbers = #tpu.dot_dimension_numbers<[1], [0], [0], [1], [0, 0, 1, 1], [], []>, precision = #tpu.contract_precision<fp32>} : vector<128x16xf32>, vector<16x128xf32>, vector<128x128xf32> -> vector<128x128xf32>
    %c0_4 = arith.constant 0 : index
    %c0_5 = arith.constant 0 : index
    %6 = vector.load %arg6[%c0_4, %c0_5] : memref<1x128xf32, #tpu.memory_space<vmem>>, vector<1x128xf32>
    %7 = vector.broadcast %6 : vector<1x128xf32> to vector<128x128xf32>
    %8 = arith.addf %5, %7 : vector<128x128xf32>
    %cst_6 = arith.constant 0.000000e+00 : f32
    %9 = vector.broadcast %cst_6 : f32 to vector<128x128xf32>
    %10 = arith.maximumf %8, %9 : vector<128x128xf32>
    %11 = math.absf %8 : vector<128x128xf32>
    %cst_7 = arith.constant 0.000000e+00 : f32
    %12 = vector.broadcast %cst_7 : f32 to vector<128x128xf32>
    %13 = arith.subf %12, %11 : vector<128x128xf32>
    %14 = math.exp %13 : vector<128x128xf32>
    %15 = math.log1p %14 : vector<128x128xf32>
    %16 = arith.addf %10, %15 : vector<128x128xf32>
    %cst_8 = arith.constant 0.693147182 : f32
    %17 = vector.broadcast %cst_8 : f32 to vector<128x128xf32>
    %18 = arith.subf %16, %17 : vector<128x128xf32>
    %c0_9 = arith.constant 0 : index
    %c0_10 = arith.constant 0 : index
    %19 = vector.load %arg7[%c0_9, %c0_10] : memref<128x128xf32, #tpu.memory_space<vmem>>, vector<128x128xf32>
    %cst_11 = arith.constant dense<0.000000e+00> : vector<128x128xf32>
    %20 = tpu.matmul %18, %19, %cst_11 {dimension_numbers = #tpu.dot_dimension_numbers<[1], [0], [0], [1], [0, 0, 1, 1], [], []>, precision = #tpu.contract_precision<fp32>} : vector<128x128xf32>, vector<128x128xf32>, vector<128x128xf32> -> vector<128x128xf32>
    %c0_12 = arith.constant 0 : index
    %c0_13 = arith.constant 0 : index
    %21 = vector.load %arg8[%c0_12, %c0_13] : memref<1x128xf32, #tpu.memory_space<vmem>>, vector<1x128xf32>
    %22 = vector.broadcast %21 : vector<1x128xf32> to vector<128x128xf32>
    %23 = arith.addf %20, %22 : vector<128x128xf32>
    %c0_14 = arith.constant 0 : index
    %c0_15 = arith.constant 0 : index
    %24 = vector.load %arg3[%c0_14, %c0_15] : memref<128x128xf32, #tpu.memory_space<vmem>>, vector<128x128xf32>
    %25 = arith.mulf %24, %23 : vector<128x128xf32>
    %c0_16 = arith.constant 0 : index
    %c0_17 = arith.constant 0 : index
    %26 = vector.load %arg4[%c0_16, %c0_17] : memref<1x128xi32, #tpu.memory_space<vmem>>, vector<1x128xi32>
    %27 = tpu.iota {dimensions = array<i32: 0>} : vector<16x128xi32>
    %28 = vector.broadcast %26 : vector<1x128xi32> to vector<16x128xi32>
    %29 = arith.cmpi eq, %28, %27 : vector<16x128xi32>
    %30 = arith.extui %29 : vector<16x128xi1> to vector<16x128xi32>
    %31 = arith.sitofp %30 : vector<16x128xi32> to vector<16x128xf32>
    %c0_18 = arith.constant 0 : index
    %c0_19 = arith.constant 0 : index
    %c0_20 = arith.constant 0 : index
    %32 = vector.load %arg9[%c0_18, %c0_19, %c0_20] : memref<1x16x128xf32, #tpu.memory_space<vmem>>, vector<1x16x128xf32>
    %33 = vector.shape_cast %32 : vector<1x16x128xf32> to vector<16x128xf32>
    %cst_21 = arith.constant dense<0.000000e+00> : vector<16x128xf32>
    %34 = tpu.matmul %31, %25, %cst_21 {dimension_numbers = #tpu.dot_dimension_numbers<[1], [0], [0], [1], [0, 0, 1, 1], [], []>, precision = #tpu.contract_precision<fp32>} : vector<16x128xf32>, vector<128x128xf32>, vector<16x128xf32> -> vector<16x128xf32>
    %35 = arith.addf %33, %34 : vector<16x128xf32>
    %c0_22 = arith.constant 0 : index
    %c0_23 = arith.constant 0 : index
    %c0_24 = arith.constant 0 : index
    %36 = vector.load %arg9[%c0_22, %c0_23, %c0_24] : memref<1x16x128xf32, #tpu.memory_space<vmem>>, vector<1x16x128xf32>
    %37 = vector.shape_cast %36 : vector<1x16x128xf32> to vector<16x128xf32>
    %38 = vector.shape_cast %35 : vector<16x128xf32> to vector<1x16x128xf32>
    tpu.vector_store %arg9[%c0_22, %c0_23, %c0_24], %38 {strides = array<i32>} : memref<1x16x128xf32, #tpu.memory_space<vmem>>, vector<1x16x128xf32>,
    return
  }
  func.func @transform_0(%arg0: i32, %arg1: i32) -> (i32, i32) {
    %c2_i32 = arith.constant 2 : i32
    %0 = arith.muli %arg0, %c2_i32 : i32
    %1 = arith.addi %0, %arg1 : i32
    %c0_i32 = arith.constant 0 : i32
    %c0_i32_0 = arith.constant 0 : i32
    return %1, %c0_i32 : i32, i32
  }
  func.func @transform_1(%arg0: i32, %arg1: i32) -> (i32, i32) {
    %c2_i32 = arith.constant 2 : i32
    %0 = arith.muli %arg0, %c2_i32 : i32
    %1 = arith.addi %0, %arg1 : i32
    %c0_i32 = arith.constant 0 : i32
    %c0_i32_0 = arith.constant 0 : i32
    return %1, %c0_i32 : i32, i32
  }
  func.func @transform_2(%arg0: i32, %arg1: i32) -> (i32, i32) {
    %c2_i32 = arith.constant 2 : i32
    %0 = arith.muli %arg0, %c2_i32 : i32
    %1 = arith.addi %0, %arg1 : i32
    %c0_i32 = arith.constant 0 : i32
    %c0_i32_0 = arith.constant 0 : i32
    return %c0_i32, %1 : i32, i32
  }
  func.func @transform_3(%arg0: i32, %arg1: i32) -> (i32, i32) {
    %c0_i32 = arith.constant 0 : i32
    %c0_i32_0 = arith.constant 0 : i32
    %c0_i32_1 = arith.constant 0 : i32
    return %c0_i32, %c0_i32_0 : i32, i32
  }
  func.func @transform_4(%arg0: i32, %arg1: i32) -> (i32, i32) {
    %c0_i32 = arith.constant 0 : i32
    %c0_i32_0 = arith.constant 0 : i32
    %c0_i32_1 = arith.constant 0 : i32
    return %c0_i32, %c0_i32_0 : i32, i32
  }
  func.func @transform_5(%arg0: i32, %arg1: i32) -> (i32, i32) {
    %c0_i32 = arith.constant 0 : i32
    %c0_i32_0 = arith.constant 0 : i32
    %c0_i32_1 = arith.constant 0 : i32
    return %c0_i32, %c0_i32_0 : i32, i32
  }
  func.func @transform_6(%arg0: i32, %arg1: i32) -> (i32, i32) {
    %c0_i32 = arith.constant 0 : i32
    %c0_i32_0 = arith.constant 0 : i32
    %c0_i32_1 = arith.constant 0 : i32
    return %c0_i32, %c0_i32_0 : i32, i32
  }
  func.func @transform_7(%arg0: i32, %arg1: i32) -> (i32, i32, i32) {
    %c0_i32 = arith.constant 0 : i32
    %c0_i32_0 = arith.constant 0 : i32
    %c0_i32_1 = arith.constant 0 : i32
    return %arg0, %c0_i32, %c0_i32_0 : i32, i32, i32
  }
}

</mosaic_0001>

<llo_original>
// kernel: tpu_custom_call.1
$region0: #{tpu_custom_call.1}
  #allocation0 [shape = 'u32[]', space=smem, size = 0x4, offset = 0x4, fixed_abs, tag = 'smem constant byte address 0x4 - core index']
  #allocation1 [shape = 'u32[72,128]{1,0:T(1,128)}', space=vmem, size = 0x9000, scoped, tag = 'internal scratch']
  %s0 = inlined_call_operand.vmem [shape: f32[256,16], index: 0, kind: input, shape index: {}]
  %s1 = inlined_call_operand.vmem [shape: f32[256,128], index: 1, kind: input, shape index: {}]
  %s2 = inlined_call_operand.vmem [shape: s32[1,256], index: 2, kind: input, shape index: {}]
  %s3 = inlined_call_operand.vmem [shape: f32[16,128], index: 3, kind: input, shape index: {}]
  %s4 = inlined_call_operand.vmem [shape: f32[1,128], index: 4, kind: input, shape index: {}]
  %s5 = inlined_call_operand.hbm [shape: f32[128,128], index: 5, kind: input, shape index: {}]
  %s6 = inlined_call_operand.vmem [shape: f32[1,128], index: 6, kind: input, shape index: {}]
  %s7 = inlined_call_operand.hbm [shape: f32[1,16,128], index: 7, kind: output, shape index: {}]
  %s8 = sld [smem:[#allocation0]]
  $region69: #{tpu_custom_call.1} parent=0
    _
  %s10 = ssub.s32 1, %s8
  %s11 = scalar_select 0, %s10, %s8
  $region1: #{tpu_custom_call.1} parent=0
    #allocation2 [shape = 'u8[65536]{0}', space=vmem, size = 0x10000, scoped, tag = 'input window, operand 5, single buffered']
    #allocation3 [shape = 's32[2]{0}', space=sflag, size = 0x8, scoped, tag = 'scoped memory for tpu_custom_call.1']
    #allocation4 [shape = 's32[2]{0}', space=sflag, size = 0x8, scoped, tag = 'scoped memory for tpu_custom_call.1']
    #allocation5 [shape = 'u8[8192]{0}', space=vmem, size = 0x2000, scoped, tag = 'output window, operand 0, single buffered']
    %12 = vsyncpa [#allocation3], 0
    %13 = vsyncpa [#allocation4], 0
    loop: start=0, step=1, limit=4
    $region2: #{tpu_custom_call.1} parent=1 // loop_pre_header
      _
    $region3: #{tpu_custom_call.1} parent=1 // loop_header
      %s15 = sphi 0, %s19
      %p16 = scmp.ge.s32.totalorder %s15, 4
      %s22 = sphi 0, %s34
      %s23 = sphi 0, %s30
      %s24 = sphi 0, %s22
      %s25 = sphi 0, %s23
      %s26 = sphi 0, %s24
      %s27 = sphi 0, %s25
      %s41 = sphi 0, %s43
      %s44 = sphi 0, %s41
      %s45 = sphi 0, %s44
      %s61 = sphi 0, %s45
      %s71 = sphi 0, %s73
      %s74 = sphi 0, %s71
      %s75 = sphi 0, %s74
      %s91 = sphi 0, %s75
      %s101 = sphi 0, %s103
      %s104 = sphi 0, %s101
      %s105 = sphi 0, %s104
      %s121 = sphi 0, %s105
      %s125 = sphi 0, %s125
      %s127 = sphi 0, %s125
      %s128 = sphi 0, %s127
      %s142 = sphi 0, %s128
      %s146 = sphi 0, %s146
      %s148 = sphi 0, %s146
      %s149 = sphi 0, %s148
      %s163 = sphi 0, %s149
      %s167 = sphi 0, %s167
      %s169 = sphi 0, %s167
      %s170 = sphi 0, %s169
      %s184 = sphi 0, %s170
      %s188 = sphi 0, %s188
      %s190 = sphi 0, %s188
      %s191 = sphi 0, %s190
      %s205 = sphi 0, %s191
      %s211 = sphi 0, %s213
      %s214 = sphi 0, %s211
      %s215 = sphi 0, %s214
      %s231 = sphi 0, %s215
    $region4: #{tpu_custom_call.1} parent=1 // loop_header_branch
      %18 = sbr.rel (%p16) target = $region8
    $region5: #{tpu_custom_call.1} parent=1 // loop_body
      %s20 = ssub.s32 %s15, 1
      %s21 = ssub.s32 %s15, 2
      %s28 = sadd.s32 1, %s23
      %p29 = scmp.ge.s32.totalorder %s28, 2
      %s30 = scalar_select %p29, 0, %s28
      %s31 = sadd.s32 1, %s22
      %s32 = scalar_select %p29, %s31, %s22
      %p33 = scmp.ge.s32.totalorder %s32, 1
      %s34 = scalar_select %p33, 0, %s32
      %s35 = smul.u32 %s22, 2
      %s36 = sadd.s32 %s35, %s23
      %s37 = smul.u32 %s34, 2
      %s38 = sadd.s32 %s37, %s30
      %s39 = ssub.s32 %s36, %s38
      %p40 = scmp.eq.s32.totalorder %s39, 0
      %s42 = sadd.s32 %s41, 1
      %s43 = scalar_select %p40, %s41, %s42
      %p46 = pneg %p40
      %p47 = scmp.eq.s32.totalorder %s15, 1
      %p48 = por %p46, %p47
      %p49 = scmp.ne.s32.totalorder %s41, %s44
      %p50 = scmp.eq.s32.totalorder %s15, 0
      %p51 = por %p49, %p50
      %p52 = scmp.ne.s32.totalorder %s41, %s44
      %p53 = scmp.eq.s32.totalorder %s20, 1
      %p54 = por %p52, %p53
      %p55 = scmp.ne.s32.totalorder %s44, %s45
      %p56 = scmp.eq.s32.totalorder %s20, 0
      %p57 = por %p55, %p56
      %p58 = scmp.ne.s32.totalorder %s44, %s45
      %p59 = scmp.eq.s32.totalorder %s21, 1
      %p60 = por %p58, %p59
      %p62 = scmp.ne.s32.totalorder %s45, %s61
      %p63 = scmp.eq.s32.totalorder %s21, 0
      %p64 = por %p62, %p63
      %s65 = smul.u32 %s22, 2
      %s66 = sadd.s32 %s65, %s23
      %s67 = smul.u32 %s34, 2
      %s68 = sadd.s32 %s67, %s30
      %s69 = ssub.s32 %s66, %s68
      %p70 = scmp.eq.s32.totalorder %s69, 0
      %s72 = sadd.s32 %s71, 1
      %s73 = scalar_select %p70, %s71, %s72
      %p76 = pneg %p70
      %p77 = scmp.eq.s32.totalorder %s15, 1
      %p78 = por %p76, %p77
      %p79 = scmp.ne.s32.totalorder %s71, %s74
      %p80 = scmp.eq.s32.totalorder %s15, 0
      %p81 = por %p79, %p80
      %p82 = scmp.ne.s32.totalorder %s71, %s74
      %p83 = scmp.eq.s32.totalorder %s20, 1
      %p84 = por %p82, %p83
      %p85 = scmp.ne.s32.totalorder %s74, %s75
      %p86 = scmp.eq.s32.totalorder %s20, 0
      %p87 = por %p85, %p86
      %p88 = scmp.ne.s32.totalorder %s74, %s75
      %p89 = scmp.eq.s32.totalorder %s21, 1
      %p90 = por %p88, %p89
      %p92 = scmp.ne.s32.totalorder %s75, %s91
      %p93 = scmp.eq.s32.totalorder %s21, 0
      %p94 = por %p92, %p93
      %s95 = smul.u32 %s22, 2
      %s96 = sadd.s32 %s95, %s23
      %s97 = smul.u32 %s34, 2
      %s98 = sadd.s32 %s97, %s30
      %s99 = ssub.s32 %s96, %s98
      %p100 = scmp.eq.s32.totalorder %s99, 0
      %s102 = sadd.s32 %s101, 1
      %s103 = scalar_select %p100, %s101, %s102
      %p106 = pneg %p100
      %p107 = scmp.eq.s32.totalorder %s15, 1
      %p108 = por %p106, %p107
      %p109 = scmp.ne.s32.totalorder %s101, %s104
      %p110 = scmp.eq.s32.totalorder %s15, 0
      %p111 = por %p109, %p110
      %p112 = scmp.ne.s32.totalorder %s101, %s104
      %p113 = scmp.eq.s32.totalorder %s20, 1
      %p114 = por %p112, %p113
      %p115 = scmp.ne.s32.totalorder %s104, %s105
      %p116 = scmp.eq.s32.totalorder %s20, 0
      %p117 = por %p115, %p116
      %p118 = scmp.ne.s32.totalorder %s104, %s105
      %p119 = scmp.eq.s32.totalorder %s21, 1
      %p120 = por %p118, %p119
      %p122 = scmp.ne.s32.totalorder %s105, %s121
      %p123 = scmp.eq.s32.totalorder %s21, 0
      %p124 = por %p122, %p123
      %s126 = sadd.s32 %s125, 1
      %p129 = scmp.eq.s32.totalorder %s15, 1
      %p130 = scmp.ne.s32.totalorder %s125, %s127
      %p131 = scmp.eq.s32.totalorder %s15, 0
      %p132 = por %p130, %p131
      %p133 = scmp.ne.s32.totalorder %s125, %s127
      %p134 = scmp.eq.s32.totalorder %s20, 1
      %p135 = por %p133, %p134
      %p136 = scmp.ne.s32.totalorder %s127, %s128
      %p137 = scmp.eq.s32.totalorder %s20, 0
      %p138 = por %p136, %p137
      %p139 = scmp.ne.s32.totalorder %s127, %s128
      %p140 = scmp.eq.s32.totalorder %s21, 1
      %p141 = por %p139, %p140
      %p143 = scmp.ne.s32.totalorder %s128, %s142
      %p144 = scmp.eq.s32.totalorder %s21, 0
      %p145 = por %p143, %p144
      %s147 = sadd.s32 %s146, 1
      %p150 = scmp.eq.s32.totalorder %s15, 1
      %p151 = scmp.ne.s32.totalorder %s146, %s148
      %p152 = scmp.eq.s32.totalorder %s15, 0
      %p153 = por %p151, %p152
      %p154 = scmp.ne.s32.totalorder %s146, %s148
      %p155 = scmp.eq.s32.totalorder %s20, 1
      %p156 = por %p154, %p155
      %p157 = scmp.ne.s32.totalorder %s148, %s149
      %p158 = scmp.eq.s32.totalorder %s20, 0
      %p159 = por %p157, %p158
      %p160 = scmp.ne.s32.totalorder %s148, %s149
      %p161 = scmp.eq.s32.totalorder %s21, 1
      %p162 = por %p160, %p161
      %p164 = scmp.ne.s32.totalorder %s149, %s163
      %p165 = scmp.eq.s32.totalorder %s21, 0
      %p166 = por %p164, %p165
      %s168 = sadd.s32 %s167, 1
      %p171 = scmp.eq.s32.totalorder %s15, 1
      %p172 = scmp.ne.s32.totalorder %s167, %s169
      %p173 = scmp.eq.s32.totalorder %s15, 0
      %p174 = por %p172, %p173
      %p175 = scmp.ne.s32.totalorder %s167, %s169
      %p176 = scmp.eq.s32.totalorder %s20, 1
      %p177 = por %p175, %p176
      %p178 = scmp.ne.s32.totalorder %s169, %s170
      %p179 = scmp.eq.s32.totalorder %s20, 0
      %p180 = por %p178, %p179
      %p181 = scmp.ne.s32.totalorder %s169, %s170
      %p182 = scmp.eq.s32.totalorder %s21, 1
      %p183 = por %p181, %p182
      %p185 = scmp.ne.s32.totalorder %s170, %s184
      %p186 = scmp.eq.s32.totalorder %s21, 0
      %p187 = por %p185, %p186
      %s189 = sadd.s32 %s188, 1
      %p192 = scmp.eq.s32.totalorder %s15, 1
      %p193 = scmp.ne.s32.totalorder %s188, %s190
      %p194 = scmp.eq.s32.totalorder %s15, 0
      %p195 = por %p193, %p194
      %p196 = scmp.ne.s32.totalorder %s188, %s190
      %p197 = scmp.eq.s32.totalorder %s20, 1
      %p198 = por %p196, %p197
      %p199 = scmp.ne.s32.totalorder %s190, %s191
      %p200 = scmp.eq.s32.totalorder %s20, 0
      %p201 = por %p199, %p200
      %p202 = scmp.ne.s32.totalorder %s190, %s191
      %p203 = scmp.eq.s32.totalorder %s21, 1
      %p204 = por %p202, %p203
      %p206 = scmp.ne.s32.totalorder %s191, %s205
      %p207 = scmp.eq.s32.totalorder %s21, 0
      %p208 = por %p206, %p207
      %s209 = ssub.s32 %s22, %s34
      %p210 = scmp.eq.s32.totalorder %s209, 0
      %s212 = sadd.s32 %s211, 1
      %s213 = scalar_select %p210, %s211, %s212
      %p216 = pneg %p210
      %p217 = scmp.eq.s32.totalorder %s15, 1
      %p218 = por %p216, %p217
      %p219 = scmp.ne.s32.totalorder %s211, %s214
      %p220 = scmp.eq.s32.totalorder %s15, 0
      %p221 = por %p219, %p220
      %p222 = scmp.ne.s32.totalorder %s211, %s214
      %p223 = scmp.eq.s32.totalorder %s20, 1
      %p224 = por %p222, %p223
      %p225 = scmp.ne.s32.totalorder %s214, %s215
      %p226 = scmp.eq.s32.totalorder %s20, 0
      %p227 = por %p225, %p226
      %p228 = scmp.ne.s32.totalorder %s214, %s215
      %p229 = scmp.eq.s32.totalorder %s21, 1
      %p230 = por %p228, %p229
      %p232 = scmp.ne.s32.totalorder %s215, %s231
      %p233 = scmp.eq.s32.totalorder %s21, 0
      %p234 = por %p232, %p233
      %p235 = scmp.le.s32.totalorder 1, %s15
      %p236 = scmp.lt.s32.totalorder %s15, 3
      %p237 = pnand %p235, %p236
      %p238 = pneg %p237
      // Predicated region
      $region9: #{tpu_custom_call.1} parent=5 // pred_check
        _
      $region10: #{tpu_custom_call.1} parent=5 // pred_check_branch
        %240 = sbr.rel (%p237) target = $region12
      $region11: #{tpu_custom_call.1} parent=5 // pred_region
        %s241 = ssub.s32 %s15, 1
        // Predicated region
        $region13: #{tpu_custom_call.1} parent=11 // pred_check
          %p242 = pneg %p138
        $region14: #{tpu_custom_call.1} parent=11 // pred_check_branch
          %244 = sbr.rel (%p242) target = $region16
        $region15: #{tpu_custom_call.1} parent=11 // pred_region
          _
        $region16: #{tpu_custom_call.1} parent=11 // pred_fallthru
          _
        // Predicated region
        $region17: #{tpu_custom_call.1} parent=11 // pred_check
          %p245 = pneg %p159
        $region18: #{tpu_custom_call.1} parent=11 // pred_check_branch
          %247 = sbr.rel (%p245) target = $region20
        $region19: #{tpu_custom_call.1} parent=11 // pred_region
          _
        $region20: #{tpu_custom_call.1} parent=11 // pred_fallthru
          _
        // Predicated region
        $region21: #{tpu_custom_call.1} parent=11 // pred_check
          %p248 = pneg %p180
        $region22: #{tpu_custom_call.1} parent=11 // pred_check_branch
          %250 = sbr.rel (%p248) target = $region24
        $region23: #{tpu_custom_call.1} parent=11 // pred_region
          %252 = vsyncadd [#allocation3], 0
          %s253 = sshll.u32 %s5, 4
          %s254 = int_to_ptr.hbm [resolvable:$true] %s253
          %s255 = sshll.u32 [#allocation2], 4
          %s256 = int_to_ptr.vmem [resolvable:$true] %s255
          %261 = dma.hbm_to_vmem [thread:$0]  %s254, 2048, %s256, [#allocation3], 128, 128, 8
        $region24: #{tpu_custom_call.1} parent=11 // pred_fallthru
          _
        // Predicated region
        $region25: #{tpu_custom_call.1} parent=11 // pred_check
          %p262 = pneg %p201
        $region26: #{tpu_custom_call.1} parent=11 // pred_check_branch
          %264 = sbr.rel (%p262) target = $region28
        $region27: #{tpu_custom_call.1} parent=11 // pred_region
          _
        $region28: #{tpu_custom_call.1} parent=11 // pred_fallthru
          _
      $region12: #{tpu_custom_call.1} parent=5 // pred_fallthru
        _
      %p265 = scmp.lt.s32.totalorder %s15, 2
      // Predicated region
      $region29: #{tpu_custom_call.1} parent=5 // pred_check
        %p266 = pneg %p265
      $region30: #{tpu_custom_call.1} parent=5 // pred_check_branch
        %268 = sbr.rel (%p266) target = $region32
      $region31: #{tpu_custom_call.1} parent=5 // pred_region
        // Predicated region
        $region33: #{tpu_custom_call.1} parent=31 // pred_check
          %p269 = pneg %p51
        $region34: #{tpu_custom_call.1} parent=31 // pred_check_branch
          %271 = sbr.rel (%p269) target = $region36
        $region35: #{tpu_custom_call.1} parent=31 // pred_region
          %s272 = smul.u32 %s22, 2
          %s273 = sadd.s32 %s272, %s23
          %s274 = smul.u32 16, %s273
          %p275 = scmp.lt.s32.totalorder %s274, 31
          %s276 = scalar_select %p275, %s274, 31
          %s277 = smul.addr %s276, 8
          %s278 = scalar_lea.vmem %s0, %s277
          %s279 = smul.u32 %s22, 2
          %s280 = sadd.s32 %s279, %s23
          %s281 = smul.u32 16, %s280
        $region36: #{tpu_custom_call.1} parent=31 // pred_fallthru
          _
        // Predicated region
        $region37: #{tpu_custom_call.1} parent=31 // pred_check
          %p282 = pneg %p81
        $region38: #{tpu_custom_call.1} parent=31 // pred_check_branch
          %284 = sbr.rel (%p282) target = $region40
        $region39: #{tpu_custom_call.1} parent=31 // pred_region
          %s285 = smul.u32 %s22, 2
          %s286 = sadd.s32 %s285, %s23
          %s287 = smul.u32 16, %s286
          %p288 = scmp.lt.s32.totalorder %s287, 31
          %s289 = scalar_select %p288, %s287, 31
          %s290 = smul.addr %s289, 8
          %s291 = scalar_lea.vmem %s1, %s290
          %s292 = smul.u32 %s22, 2
          %s293 = sadd.s32 %s292, %s23
          %s294 = smul.u32 16, %s293
        $region40: #{tpu_custom_call.1} parent=31 // pred_fallthru
          _
        // Predicated region
        $region41: #{tpu_custom_call.1} parent=31 // pred_check
          %p295 = pneg %p111
        $region42: #{tpu_custom_call.1} parent=31 // pred_check_branch
          %297 = sbr.rel (%p295) target = $region44
        $region43: #{tpu_custom_call.1} parent=31 // pred_region
          %s298 = smul.u32 %s22, 2
          %s299 = sadd.s32 %s298, %s23
          %p300 = scmp.lt.s32.totalorder %s299, 1
          %s301 = scalar_select %p300, %s299, 1
          %s302 = scalar_lea.vmem %s2, %s301
          %s303 = smul.u32 %s22, 2
          %s304 = sadd.s32 %s303, %s23
        $region44: #{tpu_custom_call.1} parent=31 // pred_fallthru
          _
      $region32: #{tpu_custom_call.1} parent=5 // pred_fallthru
        _
      %p305 = scmp.le.s32.totalorder 1, %s15
      %p306 = scmp.lt.s32.totalorder %s15, 3
      %p307 = pnand %p305, %p306
      %p308 = pneg %p307
      // Predicated region
      $region45: #{tpu_custom_call.1} parent=5 // pred_check
        _
      $region46: #{tpu_custom_call.1} parent=5 // pred_check_branch
        %310 = sbr.rel (%p307) target = $region48
      $region47: #{tpu_custom_call.1} parent=5 // pred_region
        %s311 = ssub.s32 %s15, 1
        // Predicated region
        $region49: #{tpu_custom_call.1} parent=47 // pred_check
          %p312 = pneg %p180
        $region50: #{tpu_custom_call.1} parent=47 // pred_check_branch
          %314 = sbr.rel (%p312) target = $region52
        $region51: #{tpu_custom_call.1} parent=47 // pred_region
          %316 = dma.done [#allocation3], 2048
        $region52: #{tpu_custom_call.1} parent=47 // pred_fallthru
          _
        %s317 = smul.u32 %s24, 2
        %s318 = sadd.s32 %s317, %s25
        %s319 = smul.u32 16, %s318
        %p320 = scmp.lt.s32.totalorder %s319, 31
        %s321 = scalar_select %p320, %s319, 31
        %s322 = smul.addr %s321, 8
        %s323 = scalar_lea.vmem %s0, %s322
        %p324 = pneg %p57
        %p325 = pneg %p54
        %s326 = smul.u32 %s24, 2
        %s327 = sadd.s32 %s326, %s25
        %s328 = smul.u32 16, %s327
        %p329 = scmp.lt.s32.totalorder %s328, 31
        %s330 = scalar_select %p329, %s328, 31
        %s331 = smul.addr %s330, 8
        %s332 = scalar_lea.vmem %s1, %s331
        %p333 = pneg %p87
        %p334 = pneg %p84
        %s335 = smul.u32 %s24, 2
        %s336 = sadd.s32 %s335, %s25
        %p337 = scmp.lt.s32.totalorder %s336, 1
        %s338 = scalar_select %p337, %s336, 1
        %s339 = scalar_lea.vmem %s2, %s338
        %p340 = pneg %p117
        %p341 = pneg %p114
        %p342 = pneg %p138
        %p343 = pneg %p135
        %p344 = pneg %p159
        %p345 = pneg %p156
        %p346 = pneg %p180
        %p347 = pneg %p177
        %p348 = pneg %p201
        %p349 = pneg %p198
        %p350 = pneg %p227
        %p351 = pneg %p224
        %s352 = smul.u32 %s24, 2
        %s353 = sadd.s32 %s352, %s25
        %s354 = smul.u32 16, %s353
        %p355 = scmp.lt.s32.totalorder %s354, 31
        %s356 = scalar_select %p355, %s354, 31
        %s357 = smul.addr %s356, 8
        %s358 = scalar_lea.vmem %s0, %s357
        %s359 = smul.u32 %s24, 2
        %s360 = sadd.s32 %s359, %s25
        %s361 = smul.u32 16, %s360
        %s362 = smul.u32 %s24, 2
        %s363 = sadd.s32 %s362, %s25
        %s364 = smul.u32 16, %s363
        %p365 = scmp.lt.s32.totalorder %s364, 31
        %s366 = scalar_select %p365, %s364, 31
        %s367 = smul.addr %s366, 8
        %s368 = scalar_lea.vmem %s1, %s367
        %s369 = smul.u32 %s24, 2
        %s370 = sadd.s32 %s369, %s25
        %s371 = smul.u32 16, %s370
        %s372 = smul.u32 %s24, 2
        %s373 = sadd.s32 %s372, %s25
        %p374 = scmp.lt.s32.totalorder %s373, 1
        %s375 = scalar_select %p374, %s373, 1
        %s376 = scalar_lea.vmem %s2, %s375
        %s377 = smul.u32 %s24, 2
        %s378 = sadd.s32 %s377, %s25
        %p379 = scmp.eq.s32.totalorder %s25, 0
        // Predicated region
        $region53: #{tpu_custom_call.1} parent=47 // pred_check
          %p380 = pneg %p379
        $region54: #{tpu_custom_call.1} parent=47 // pred_check_branch
          %382 = sbr.rel (%p380) target = $region56
        $region55: #{tpu_custom_call.1} parent=47 // pred_region
          %383 = vst [vmem:[#allocation5] sm:$0xff] 0.0
          %384 = vst [vmem:[#allocation5 + $0x8] sm:$0xff] 0.0
        $region56: #{tpu_custom_call.1} parent=47 // pred_fallthru
          _
        %v385 = vld [vmem:[%s358] sm:$0xff]
        %v386 = vld [vmem:[%s358 + $0x8] sm:$0xff]
        %v387 = vld [vmem:[%s358 + $0x10] sm:$0xff]
        %v388 = vld [vmem:[%s358 + $0x18] sm:$0xff]
        %v389 = vld [vmem:[%s358 + $0x20] sm:$0xff]
        %v390 = vld [vmem:[%s358 + $0x28] sm:$0xff]
        %v391 = vld [vmem:[%s358 + $0x30] sm:$0xff]
        %v392 = vld [vmem:[%s358 + $0x38] sm:$0xff]
        %v393 = vld [vmem:[%s358 + $0x40] sm:$0xff]
        %v394 = vld [vmem:[%s358 + $0x48] sm:$0xff]
        %v395 = vld [vmem:[%s358 + $0x50] sm:$0xff]
        %v396 = vld [vmem:[%s358 + $0x58] sm:$0xff]
        %v397 = vld [vmem:[%s358 + $0x60] sm:$0xff]
        %v398 = vld [vmem:[%s358 + $0x68] sm:$0xff]
        %v399 = vld [vmem:[%s358 + $0x70] sm:$0xff]
        %v400 = vld [vmem:[%s358 + $0x78] sm:$0xff]
        %v401 = vld [vmem:[%s3] sm:$0xff]
        %v402 = vld [vmem:[%s3 + $0x8] sm:$0xff]
        %v403 = vld [vmem:[%s4] sm:$0x1]
        %v405 = vperm.slane %v403, 0
        %vm407 = vcmask 130048
        %v409 = vsel %vm407, %v385, 0
        %v412 = vsel %vm407, %v386, 0
        %v415 = vsel %vm407, %v387, 0
        %v418 = vsel %vm407, %v388, 0
        %v421 = vsel %vm407, %v389, 0
        %v424 = vsel %vm407, %v390, 0
        %v427 = vsel %vm407, %v391, 0
        %v430 = vsel %vm407, %v392, 0
        %v433 = vsel %vm407, %v393, 0
        %v436 = vsel %vm407, %v394, 0
        %v439 = vsel %vm407, %v395, 0
        %v442 = vsel %vm407, %v396, 0
        %v445 = vsel %vm407, %v397, 0
        %v448 = vsel %vm407, %v398, 0
        %v451 = vsel %vm407, %v399, 0
        %v454 = vsel %vm407, %v400, 0
        %456 = vmatpush.msra.mxu0 0.0
        %457 = vmatpush.msra.mxu0 0.0
        %458 = vmatpush.msra.mxu0 0.0
        %459 = vmatpush.msra.mxu0 0.0
        %460 = vmatpush.msra.mxu0 0.0
        %461 = vmatpush.msra.mxu0 0.0
        %462 = vmatpush.msra.mxu0 0.0
        %463 = vmatpush.msra.mxu0 0.0
        %464 = vmatpush.msra.mxu0 0.0
        %465 = vmatpush.msra.mxu0 0.0
        %466 = vmatpush.msra.mxu0 0.0
        %467 = vmatpush.msra.mxu0 0.0
        %468 = vmatpush.msra.mxu0 0.0
        %469 = vmatpush.msra.mxu0 0.0
        %v470 = vand.u32 %v402, 4294901760
        %471 = vmatpush.msra.mxu0 %v470
        %v472 = vand.u32 %v401, 4294901760
        %473 = vmatpush.msra.mxu0 %v472
        %v474 = vand.u32 %v409, 4294901760
        %v475 = vsub.f32 %v409, %v474
        %v476 = vand.u32 %v475, 4294901760
        %v477 = vsub.f32 %v475, %v476
        %v478 = vand.u32 %v477, 4294901760
        %479 = vmatmul.f32.gmra.mxu0 %v478
        %v480 = vpop.f32.mrf.mxu0
        %v481 = vadd.f32 %v405, %v480
        %v482 = vand.u32 %v412, 4294901760
        %v483 = vsub.f32 %v412, %v482
        %v484 = vand.u32 %v483, 4294901760
        %v485 = vsub.f32 %v483, %v484
        %v486 = vand.u32 %v485, 4294901760
        %487 = vmatmul.f32.gmra.mxu0 %v486
        %v488 = vpop.f32.mrf.mxu0
        %v489 = vadd.f32 %v405, %v488
        %v490 = vand.u32 %v415, 4294901760
        %v491 = vsub.f32 %v415, %v490
        %v492 = vand.u32 %v491, 4294901760
        %v493 = vsub.f32 %v491, %v492
        %v494 = vand.u32 %v493, 4294901760
        %495 = vmatmul.f32.gmra.mxu0 %v494
        %v496 = vpop.f32.mrf.mxu0
        %v497 = vadd.f32 %v405, %v496
        %v498 = vand.u32 %v418, 4294901760
        %v499 = vsub.f32 %v418, %v498
        %v500 = vand.u32 %v499, 4294901760
        %v501 = vsub.f32 %v499, %v500
        %v502 = vand.u32 %v501, 4294901760
        %503 = vmatmul.f32.gmra.mxu0 %v502
        %v504 = vpop.f32.mrf.mxu0
        %v505 = vadd.f32 %v405, %v504
        %v506 = vand.u32 %v421, 4294901760
        %v507 = vsub.f32 %v421, %v506
        %v508 = vand.u32 %v507, 4294901760
        %v509 = vsub.f32 %v507, %v508
        %v510 = vand.u32 %v509, 4294901760
        %511 = vmatmul.f32.gmra.mxu0 %v510
        %v512 = vpop.f32.mrf.mxu0
        %v513 = vadd.f32 %v405, %v512
        %v514 = vand.u32 %v424, 4294901760
        %v515 = vsub.f32 %v424, %v514
        %v516 = vand.u32 %v515, 4294901760
        %v517 = vsub.f32 %v515, %v516
        %v518 = vand.u32 %v517, 4294901760
        %519 = vmatmul.f32.gmra.mxu0 %v518
        %v520 = vpop.f32.mrf.mxu0
        %v521 = vadd.f32 %v405, %v520
        %v522 = vand.u32 %v427, 4294901760
        %v523 = vsub.f32 %v427, %v522
        %v524 = vand.u32 %v523, 4294901760
        %v525 = vsub.f32 %v523, %v524
        %v526 = vand.u32 %v525, 4294901760
        %527 = vmatmul.f32.gmra.mxu0 %v526
        %v528 = vpop.f32.mrf.mxu0
        %v529 = vadd.f32 %v405, %v528
        %v530 = vand.u32 %v430, 4294901760
        %v531 = vsub.f32 %v430, %v530
        %v532 = vand.u32 %v531, 4294901760
        %v533 = vsub.f32 %v531, %v532
        %v534 = vand.u32 %v533, 4294901760
        %535 = vmatmul.f32.gmra.mxu0 %v534
        %v536 = vpop.f32.mrf.mxu0
        %v537 = vadd.f32 %v405, %v536
        %v538 = vand.u32 %v433, 4294901760
        %v539 = vsub.f32 %v433, %v538
        %v540 = vand.u32 %v539, 4294901760
        %v541 = vsub.f32 %v539, %v540
        %v542 = vand.u32 %v541, 4294901760
        %543 = vmatmul.f32.gmra.mxu0 %v542
        %v544 = vpop.f32.mrf.mxu0
        %v545 = vadd.f32 %v405, %v544
        %v546 = vand.u32 %v436, 4294901760
        %v547 = vsub.f32 %v436, %v546
        %v548 = vand.u32 %v547, 4294901760
        %v549 = vsub.f32 %v547, %v548
        %v550 = vand.u32 %v549, 4294901760
        %551 = vmatmul.f32.gmra.mxu0 %v550
        %v552 = vpop.f32.mrf.mxu0
        %v553 = vadd.f32 %v405, %v552
        %v554 = vand.u32 %v439, 4294901760
        %v555 = vsub.f32 %v439, %v554
        %v556 = vand.u32 %v555, 4294901760
        %v557 = vsub.f32 %v555, %v556
        %v558 = vand.u32 %v557, 4294901760
        %559 = vmatmul.f32.gmra.mxu0 %v558
        %v560 = vpop.f32.mrf.mxu0
        %v561 = vadd.f32 %v405, %v560
        %v562 = vand.u32 %v442, 4294901760
        %v563 = vsub.f32 %v442, %v562
        %v564 = vand.u32 %v563, 4294901760
        %v565 = vsub.f32 %v563, %v564
        %v566 = vand.u32 %v565, 4294901760
        %567 = vmatmul.f32.gmra.mxu0 %v566
        %v568 = vpop.f32.mrf.mxu0
        %v569 = vadd.f32 %v405, %v568
        %v570 = vand.u32 %v445, 4294901760
        %v571 = vsub.f32 %v445, %v570
        %v572 = vand.u32 %v571, 4294901760
        %v573 = vsub.f32 %v571, %v572
        %v574 = vand.u32 %v573, 4294901760
        %575 = vmatmul.f32.gmra.mxu0 %v574
        %v576 = vpop.f32.mrf.mxu0
        %v577 = vadd.f32 %v405, %v576
        %v578 = vand.u32 %v448, 4294901760
        %v579 = vsub.f32 %v448, %v578
        %v580 = vand.u32 %v579, 4294901760
        %v581 = vsub.f32 %v579, %v580
        %v582 = vand.u32 %v581, 4294901760
        %583 = vmatmul.f32.gmra.mxu0 %v582
        %v584 = vpop.f32.mrf.mxu0
        %v585 = vadd.f32 %v405, %v584
        %v586 = vand.u32 %v451, 4294901760
        %v587 = vsub.f32 %v451, %v586
        %v588 = vand.u32 %v587, 4294901760
        %v589 = vsub.f32 %v587, %v588
        %v590 = vand.u32 %v589, 4294901760
        %591 = vmatmul.f32.gmra.mxu0 %v590
        %v592 = vpop.f32.mrf.mxu0
        %v593 = vadd.f32 %v405, %v592
        %v594 = vand.u32 %v454, 4294901760
        %v595 = vsub.f32 %v454, %v594
        %v596 = vand.u32 %v595, 4294901760
        %v597 = vsub.f32 %v595, %v596
        %v598 = vand.u32 %v597, 4294901760
        %599 = vmatmul.f32.gmra.mxu0 %v598
        %v600 = vpop.f32.mrf.mxu0
        %v601 = vadd.f32 %v405, %v600
        %602 = vdwg.mxu0
        %603 = vmatpush.msra.mxu0 0.0
        %604 = vmatpush.msra.mxu0 0.0
        %605 = vmatpush.msra.mxu0 0.0
        %606 = vmatpush.msra.mxu0 0.0
        %607 = vmatpush.msra.mxu0 0.0
        %608 = vmatpush.msra.mxu0 0.0
        %609 = vmatpush.msra.mxu0 0.0
        %610 = vmatpush.msra.mxu0 0.0
        %611 = vmatpush.msra.mxu0 0.0
        %612 = vmatpush.msra.mxu0 0.0
        %613 = vmatpush.msra.mxu0 0.0
        %614 = vmatpush.msra.mxu0 0.0
        %615 = vmatpush.msra.mxu0 0.0
        %616 = vmatpush.msra.mxu0 0.0
        %v617 = vand.u32 %v402, 4294901760
        %v618 = vsub.f32 %v402, %v617
        %v619 = vand.u32 %v618, 4294901760
        %v620 = vsub.f32 %v618, %v619
        %v621 = vand.u32 %v620, 4294901760
        %622 = vmatpush.msra.mxu0 %v621
        %v623 = vand.u32 %v401, 4294901760
        %v624 = vsub.f32 %v401, %v623
        %v625 = vand.u32 %v624, 4294901760
        %v626 = vsub.f32 %v624, %v625
        %v627 = vand.u32 %v626, 4294901760
        %628 = vmatpush.msra.mxu0 %v627
        %v629 = vand.u32 %v409, 4294901760
        %630 = vmatmul.f32.gmra.mxu0 %v629
        %v631 = vpop.f32.mrf.mxu0
        %v632 = vadd.f32 %v481, %v631
        %v633 = vand.u32 %v412, 4294901760
        %634 = vmatmul.f32.gmra.mxu0 %v633
        %v635 = vpop.f32.mrf.mxu0
        %v636 = vadd.f32 %v489, %v635
        %v637 = vand.u32 %v415, 4294901760
        %638 = vmatmul.f32.gmra.mxu0 %v637
        %v639 = vpop.f32.mrf.mxu0
        %v640 = vadd.f32 %v497, %v639
        %v641 = vand.u32 %v418, 4294901760
        %642 = vmatmul.f32.gmra.mxu0 %v641
        %v643 = vpop.f32.mrf.mxu0
        %v644 = vadd.f32 %v505, %v643
        %v645 = vand.u32 %v421, 4294901760
        %646 = vmatmul.f32.gmra.mxu0 %v645
        %v647 = vpop.f32.mrf.mxu0
        %v648 = vadd.f32 %v513, %v647
        %v649 = vand.u32 %v424, 4294901760
        %650 = vmatmul.f32.gmra.mxu0 %v649
        %v651 = vpop.f32.mrf.mxu0
        %v652 = vadd.f32 %v521, %v651
        %v653 = vand.u32 %v427, 4294901760
        %654 = vmatmul.f32.gmra.mxu0 %v653
        %v655 = vpop.f32.mrf.mxu0
        %v656 = vadd.f32 %v529, %v655
        %v657 = vand.u32 %v430, 4294901760
        %658 = vmatmul.f32.gmra.mxu0 %v657
        %v659 = vpop.f32.mrf.mxu0
        %v660 = vadd.f32 %v537, %v659
        %v661 = vand.u32 %v433, 4294901760
        %662 = vmatmul.f32.gmra.mxu0 %v661
        %v663 = vpop.f32.mrf.mxu0
        %v664 = vadd.f32 %v545, %v663
        %v665 = vand.u32 %v436, 4294901760
        %666 = vmatmul.f32.gmra.mxu0 %v665
        %v667 = vpop.f32.mrf.mxu0
        %v668 = vadd.f32 %v553, %v667
        %v669 = vand.u32 %v439, 4294901760
        %670 = vmatmul.f32.gmra.mxu0 %v669
        %v671 = vpop.f32.mrf.mxu0
        %v672 = vadd.f32 %v561, %v671
        %v673 = vand.u32 %v442, 4294901760
        %674 = vmatmul.f32.gmra.mxu0 %v673
        %v675 = vpop.f32.mrf.mxu0
        %v676 = vadd.f32 %v569, %v675
        %v677 = vand.u32 %v445, 4294901760
        %678 = vmatmul.f32.gmra.mxu0 %v677
        %v679 = vpop.f32.mrf.mxu0
        %v680 = vadd.f32 %v577, %v679
        %v681 = vand.u32 %v448, 4294901760
        %682 = vmatmul.f32.gmra.mxu0 %v681
        %v683 = vpop.f32.mrf.mxu0
        %v684 = vadd.f32 %v585, %v683
        %v685 = vand.u32 %v451, 4294901760
        %686 = vmatmul.f32.gmra.mxu0 %v685
        %v687 = vpop.f32.mrf.mxu0
        %v688 = vadd.f32 %v593, %v687
        %v689 = vand.u32 %v454, 4294901760
        %690 = vmatmul.f32.gmra.mxu0 %v689
        %v691 = vpop.f32.mrf.mxu0
        %v692 = vadd.f32 %v601, %v691
        %693 = vdwg.mxu0
        %694 = vmatpush.msra.mxu0 0.0
        %695 = vmatpush.msra.mxu0 0.0
        %696 = vmatpush.msra.mxu0 0.0
        %697 = vmatpush.msra.mxu0 0.0
        %698 = vmatpush.msra.mxu0 0.0
        %699 = vmatpush.msra.mxu0 0.0
        %700 = vmatpush.msra.mxu0 0.0
        %701 = vmatpush.msra.mxu0 0.0
        %702 = vmatpush.msra.mxu0 0.0
        %703 = vmatpush.msra.mxu0 0.0
        %704 = vmatpush.msra.mxu0 0.0
        %705 = vmatpush.msra.mxu0 0.0
        %706 = vmatpush.msra.mxu0 0.0
        %707 = vmatpush.msra.mxu0 0.0
        %v708 = vand.u32 %v402, 4294901760
        %v709 = vsub.f32 %v402, %v708
        %710 = vmatpush.msra.mxu0 %v709
        %v711 = vand.u32 %v401, 4294901760
        %v712 = vsub.f32 %v401, %v711
        %713 = vmatpush.msra.mxu0 %v712
        %v714 = vand.u32 %v409, 4294901760
        %v715 = vsub.f32 %v409, %v714
        %716 = vmatmul.f32.gmra.mxu0 %v715
        %v717 = vpop.f32.mrf.mxu0
        %v718 = vadd.f32 %v632, %v717
        %v719 = vand.u32 %v412, 4294901760
        %v720 = vsub.f32 %v412, %v719
        %721 = vmatmul.f32.gmra.mxu0 %v720
        %v722 = vpop.f32.mrf.mxu0
        %v723 = vadd.f32 %v636, %v722
        %v724 = vand.u32 %v415, 4294901760
        %v725 = vsub.f32 %v415, %v724
        %726 = vmatmul.f32.gmra.mxu0 %v725
        %v727 = vpop.f32.mrf.mxu0
        %v728 = vadd.f32 %v640, %v727
        %v729 = vand.u32 %v418, 4294901760
        %v730 = vsub.f32 %v418, %v729
        %731 = vmatmul.f32.gmra.mxu0 %v730
        %v732 = vpop.f32.mrf.mxu0
        %v733 = vadd.f32 %v644, %v732
        %v734 = vand.u32 %v421, 4294901760
        %v735 = vsub.f32 %v421, %v734
        %736 = vmatmul.f32.gmra.mxu0 %v735
        %v737 = vpop.f32.mrf.mxu0
        %v738 = vadd.f32 %v648, %v737
        %v739 = vand.u32 %v424, 4294901760
        %v740 = vsub.f32 %v424, %v739
        %741 = vmatmul.f32.gmra.mxu0 %v740
        %v742 = vpop.f32.mrf.mxu0
        %v743 = vadd.f32 %v652, %v742
        %v744 = vand.u32 %v427, 4294901760
        %v745 = vsub.f32 %v427, %v744
        %746 = vmatmul.f32.gmra.mxu0 %v745
        %v747 = vpop.f32.mrf.mxu0
        %v748 = vadd.f32 %v656, %v747
        %v749 = vand.u32 %v430, 4294901760
        %v750 = vsub.f32 %v430, %v749
        %751 = vmatmul.f32.gmra.mxu0 %v750
        %v752 = vpop.f32.mrf.mxu0
        %v753 = vadd.f32 %v660, %v752
        %v754 = vand.u32 %v433, 4294901760
        %v755 = vsub.f32 %v433, %v754
        %756 = vmatmul.f32.gmra.mxu0 %v755
        %v757 = vpop.f32.mrf.mxu0
        %v758 = vadd.f32 %v664, %v757
        %v759 = vand.u32 %v436, 4294901760
        %v760 = vsub.f32 %v436, %v759
        %761 = vmatmul.f32.gmra.mxu0 %v760
        %v762 = vpop.f32.mrf.mxu0
        %v763 = vadd.f32 %v668, %v762
        %v764 = vand.u32 %v439, 4294901760
        %v765 = vsub.f32 %v439, %v764
        %766 = vmatmul.f32.gmra.mxu0 %v765
        %v767 = vpop.f32.mrf.mxu0
        %v768 = vadd.f32 %v672, %v767
        %v769 = vand.u32 %v442, 4294901760
        %v770 = vsub.f32 %v442, %v769
        %771 = vmatmul.f32.gmra.mxu0 %v770
        %v772 = vpop.f32.mrf.mxu0
        %v773 = vadd.f32 %v676, %v772
        %v774 = vand.u32 %v445, 4294901760
        %v775 = vsub.f32 %v445, %v774
        %776 = vmatmul.f32.gmra.mxu0 %v775
        %v777 = vpop.f32.mrf.mxu0
        %v778 = vadd.f32 %v680, %v777
        %v779 = vand.u32 %v448, 4294901760
        %v780 = vsub.f32 %v448, %v779
        %781 = vmatmul.f32.gmra.mxu0 %v780
        %v782 = vpop.f32.mrf.mxu0
        %v783 = vadd.f32 %v684, %v782
        %v784 = vand.u32 %v451, 4294901760
        %v785 = vsub.f32 %v451, %v784
        %786 = vmatmul.f32.gmra.mxu0 %v785
        %v787 = vpop.f32.mrf.mxu0
        %v788 = vadd.f32 %v688, %v787
        %v789 = vand.u32 %v454, 4294901760
        %v790 = vsub.f32 %v454, %v789
        %791 = vmatmul.f32.gmra.mxu0 %v790
        %v792 = vpop.f32.mrf.mxu0
        %v793 = vadd.f32 %v692, %v792
        %794 = vdwg.mxu0
        %795 = vmatpush.msra.mxu0 0.0
        %796 = vmatpush.msra.mxu0 0.0
        %797 = vmatpush.msra.mxu0 0.0
        %798 = vmatpush.msra.mxu0 0.0
        %799 = vmatpush.msra.mxu0 0.0
        %800 = vmatpush.msra.mxu0 0.0
        %801 = vmatpush.msra.mxu0 0.0
        %802 = vmatpush.msra.mxu0 0.0
        %803 = vmatpush.msra.mxu0 0.0
        %804 = vmatpush.msra.mxu0 0.0
        %805 = vmatpush.msra.mxu0 0.0
        %806 = vmatpush.msra.mxu0 0.0
        %807 = vmatpush.msra.mxu0 0.0
        %808 = vmatpush.msra.mxu0 0.0
        %v809 = vand.u32 %v402, 4294901760
        %810 = vmatpush.msra.mxu0 %v809
        %v811 = vand.u32 %v401, 4294901760
        %812 = vmatpush.msra.mxu0 %v811
        %v813 = vand.u32 %v409, 4294901760
        %v814 = vsub.f32 %v409, %v813
        %v815 = vand.u32 %v814, 4294901760
        %816 = vmatmul.f32.gmra.mxu0 %v815
        %v817 = vpop.f32.mrf.mxu0
        %v818 = vadd.f32 %v718, %v817
        %v819 = vand.u32 %v412, 4294901760
        %v820 = vsub.f32 %v412, %v819
        %v821 = vand.u32 %v820, 4294901760
        %822 = vmatmul.f32.gmra.mxu0 %v821
        %v823 = vpop.f32.mrf.mxu0
        %v824 = vadd.f32 %v723, %v823
        %v825 = vand.u32 %v415, 4294901760
        %v826 = vsub.f32 %v415, %v825
        %v827 = vand.u32 %v826, 4294901760
        %828 = vmatmul.f32.gmra.mxu0 %v827
        %v829 = vpop.f32.mrf.mxu0
        %v830 = vadd.f32 %v728, %v829
        %v831 = vand.u32 %v418, 4294901760
        %v832 = vsub.f32 %v418, %v831
        %v833 = vand.u32 %v832, 4294901760
        %834 = vmatmul.f32.gmra.mxu0 %v833
        %v835 = vpop.f32.mrf.mxu0
        %v836 = vadd.f32 %v733, %v835
        %v837 = vand.u32 %v421, 4294901760
        %v838 = vsub.f32 %v421, %v837
        %v839 = vand.u32 %v838, 4294901760
        %840 = vmatmul.f32.gmra.mxu0 %v839
        %v841 = vpop.f32.mrf.mxu0
        %v842 = vadd.f32 %v738, %v841
        %v843 = vand.u32 %v424, 4294901760
        %v844 = vsub.f32 %v424, %v843
        %v845 = vand.u32 %v844, 4294901760
        %846 = vmatmul.f32.gmra.mxu0 %v845
        %v847 = vpop.f32.mrf.mxu0
        %v848 = vadd.f32 %v743, %v847
        %v849 = vand.u32 %v427, 4294901760
        %v850 = vsub.f32 %v427, %v849
        %v851 = vand.u32 %v850, 4294901760
        %852 = vmatmul.f32.gmra.mxu0 %v851
        %v853 = vpop.f32.mrf.mxu0
        %v854 = vadd.f32 %v748, %v853
        %v855 = vand.u32 %v430, 4294901760
        %v856 = vsub.f32 %v430, %v855
        %v857 = vand.u32 %v856, 4294901760
        %858 = vmatmul.f32.gmra.mxu0 %v857
        %v859 = vpop.f32.mrf.mxu0
        %v860 = vadd.f32 %v753, %v859
        %v861 = vand.u32 %v433, 4294901760
        %v862 = vsub.f32 %v433, %v861
        %v863 = vand.u32 %v862, 4294901760
        %864 = vmatmul.f32.gmra.mxu0 %v863
        %v865 = vpop.f32.mrf.mxu0
        %v866 = vadd.f32 %v758, %v865
        %v867 = vand.u32 %v436, 4294901760
        %v868 = vsub.f32 %v436, %v867
        %v869 = vand.u32 %v868, 4294901760
        %870 = vmatmul.f32.gmra.mxu0 %v869
        %v871 = vpop.f32.mrf.mxu0
        %v872 = vadd.f32 %v763, %v871
        %v873 = vand.u32 %v439, 4294901760
        %v874 = vsub.f32 %v439, %v873
        %v875 = vand.u32 %v874, 4294901760
        %876 = vmatmul.f32.gmra.mxu0 %v875
        %v877 = vpop.f32.mrf.mxu0
        %v878 = vadd.f32 %v768, %v877
        %v879 = vand.u32 %v442, 4294901760
        %v880 = vsub.f32 %v442, %v879
        %v881 = vand.u32 %v880, 4294901760
        %882 = vmatmul.f32.gmra.mxu0 %v881
        %v883 = vpop.f32.mrf.mxu0
        %v884 = vadd.f32 %v773, %v883
        %v885 = vand.u32 %v445, 4294901760
        %v886 = vsub.f32 %v445, %v885
        %v887 = vand.u32 %v886, 4294901760
        %888 = vmatmul.f32.gmra.mxu0 %v887
        %v889 = vpop.f32.mrf.mxu0
        %v890 = vadd.f32 %v778, %v889
        %v891 = vand.u32 %v448, 4294901760
        %v892 = vsub.f32 %v448, %v891
        %v893 = vand.u32 %v892, 4294901760
        %894 = vmatmul.f32.gmra.mxu0 %v893
        %v895 = vpop.f32.mrf.mxu0
        %v896 = vadd.f32 %v783, %v895
        %v897 = vand.u32 %v451, 4294901760
        %v898 = vsub.f32 %v451, %v897
        %v899 = vand.u32 %v898, 4294901760
        %900 = vmatmul.f32.gmra.mxu0 %v899
        %v901 = vpop.f32.mrf.mxu0
        %v902 = vadd.f32 %v788, %v901
        %v903 = vand.u32 %v454, 4294901760
        %v904 = vsub.f32 %v454, %v903
        %v905 = vand.u32 %v904, 4294901760
        %906 = vmatmul.f32.gmra.mxu0 %v905
        %v907 = vpop.f32.mrf.mxu0
        %v908 = vadd.f32 %v793, %v907
        %909 = vdwg.mxu0
        %910 = vmatpush.msra.mxu0 0.0
        %911 = vmatpush.msra.mxu0 0.0
        %912 = vmatpush.msra.mxu0 0.0
        %913 = vmatpush.msra.mxu0 0.0
        %914 = vmatpush.msra.mxu0 0.0
        %915 = vmatpush.msra.mxu0 0.0
        %916 = vmatpush.msra.mxu0 0.0
        %917 = vmatpush.msra.mxu0 0.0
        %918 = vmatpush.msra.mxu0 0.0
        %919 = vmatpush.msra.mxu0 0.0
        %920 = vmatpush.msra.mxu0 0.0
        %921 = vmatpush.msra.mxu0 0.0
        %922 = vmatpush.msra.mxu0 0.0
        %923 = vmatpush.msra.mxu0 0.0
        %v924 = vand.u32 %v402, 4294901760
        %v925 = vsub.f32 %v402, %v924
        %v926 = vand.u32 %v925, 4294901760
        %927 = vmatpush.msra.mxu0 %v926
        %v928 = vand.u32 %v401, 4294901760
        %v929 = vsub.f32 %v401, %v928
        %v930 = vand.u32 %v929, 4294901760
        %931 = vmatpush.msra.mxu0 %v930
        %v932 = vand.u32 %v409, 4294901760
        %933 = vmatmul.f32.gmra.mxu0 %v932
        %v934 = vpop.f32.mrf.mxu0
        %v935 = vadd.f32 %v818, %v934
        %v936 = vand.u32 %v412, 4294901760
        %937 = vmatmul.f32.gmra.mxu0 %v936
        %v938 = vpop.f32.mrf.mxu0
        %v939 = vadd.f32 %v824, %v938
        %v940 = vand.u32 %v415, 4294901760
        %941 = vmatmul.f32.gmra.mxu0 %v940
        %v942 = vpop.f32.mrf.mxu0
        %v943 = vadd.f32 %v830, %v942
        %v944 = vand.u32 %v418, 4294901760
        %945 = vmatmul.f32.gmra.mxu0 %v944
        %v946 = vpop.f32.mrf.mxu0
        %v947 = vadd.f32 %v836, %v946
        %v948 = vand.u32 %v421, 4294901760
        %949 = vmatmul.f32.gmra.mxu0 %v948
        %v950 = vpop.f32.mrf.mxu0
        %v951 = vadd.f32 %v842, %v950
        %v952 = vand.u32 %v424, 4294901760
        %953 = vmatmul.f32.gmra.mxu0 %v952
        %v954 = vpop.f32.mrf.mxu0
        %v955 = vadd.f32 %v848, %v954
        %v956 = vand.u32 %v427, 4294901760
        %957 = vmatmul.f32.gmra.mxu0 %v956
        %v958 = vpop.f32.mrf.mxu0
        %v959 = vadd.f32 %v854, %v958
        %v960 = vand.u32 %v430, 4294901760
        %961 = vmatmul.f32.gmra.mxu0 %v960
        %v962 = vpop.f32.mrf.mxu0
        %v963 = vadd.f32 %v860, %v962
        %v964 = vand.u32 %v433, 4294901760
        %965 = vmatmul.f32.gmra.mxu0 %v964
        %v966 = vpop.f32.mrf.mxu0
        %v967 = vadd.f32 %v866, %v966
        %v968 = vand.u32 %v436, 4294901760
        %969 = vmatmul.f32.gmra.mxu0 %v968
        %v970 = vpop.f32.mrf.mxu0
        %v971 = vadd.f32 %v872, %v970
        %v972 = vand.u32 %v439, 4294901760
        %973 = vmatmul.f32.gmra.mxu0 %v972
        %v974 = vpop.f32.mrf.mxu0
        %v975 = vadd.f32 %v878, %v974
        %v976 = vand.u32 %v442, 4294901760
        %977 = vmatmul.f32.gmra.mxu0 %v976
        %v978 = vpop.f32.mrf.mxu0
        %v979 = vadd.f32 %v884, %v978
        %v980 = vand.u32 %v445, 4294901760
        %981 = vmatmul.f32.gmra.mxu0 %v980
        %v982 = vpop.f32.mrf.mxu0
        %v983 = vadd.f32 %v890, %v982
        %v984 = vand.u32 %v448, 4294901760
        %985 = vmatmul.f32.gmra.mxu0 %v984
        %v986 = vpop.f32.mrf.mxu0
        %v987 = vadd.f32 %v896, %v986
        %v988 = vand.u32 %v451, 4294901760
        %989 = vmatmul.f32.gmra.mxu0 %v988
        %v990 = vpop.f32.mrf.mxu0
        %v991 = vadd.f32 %v902, %v990
        %v992 = vand.u32 %v454, 4294901760
        %993 = vmatmul.f32.gmra.mxu0 %v992
        %v994 = vpop.f32.mrf.mxu0
        %v995 = vadd.f32 %v908, %v994
        %996 = vdwg.mxu0
        %997 = vmatpush.msra.mxu0 0.0
        %998 = vmatpush.msra.mxu0 0.0
        %999 = vmatpush.msra.mxu0 0.0
        %1000 = vmatpush.msra.mxu0 0.0
        %1001 = vmatpush.msra.mxu0 0.0
        %1002 = vmatpush.msra.mxu0 0.0
        %1003 = vmatpush.msra.mxu0 0.0
        %1004 = vmatpush.msra.mxu0 0.0
        %1005 = vmatpush.msra.mxu0 0.0
        %1006 = vmatpush.msra.mxu0 0.0
        %1007 = vmatpush.msra.mxu0 0.0
        %1008 = vmatpush.msra.mxu0 0.0
        %1009 = vmatpush.msra.mxu0 0.0
        %1010 = vmatpush.msra.mxu0 0.0
        %v1011 = vand.u32 %v402, 4294901760
        %1012 = vmatpush.msra.mxu0 %v1011
        %v1013 = vand.u32 %v401, 4294901760
        %1014 = vmatpush.msra.mxu0 %v1013
        %v1015 = vand.u32 %v409, 4294901760
        %1016 = vmatmul.f32.gmra.mxu0 %v1015
        %v1017 = vpop.f32.mrf.mxu0
        %v1018 = vadd.f32 %v935, %v1017
        %v1019 = vand.u32 %v412, 4294901760
        %1020 = vmatmul.f32.gmra.mxu0 %v1019
        %v1021 = vpop.f32.mrf.mxu0
        %v1022 = vadd.f32 %v939, %v1021
        %v1023 = vand.u32 %v415, 4294901760
        %1024 = vmatmul.f32.gmra.mxu0 %v1023
        %v1025 = vpop.f32.mrf.mxu0
        %v1026 = vadd.f32 %v943, %v1025
        %v1027 = vand.u32 %v418, 4294901760
        %1028 = vmatmul.f32.gmra.mxu0 %v1027
        %v1029 = vpop.f32.mrf.mxu0
        %v1030 = vadd.f32 %v947, %v1029
        %v1031 = vand.u32 %v421, 4294901760
        %1032 = vmatmul.f32.gmra.mxu0 %v1031
        %v1033 = vpop.f32.mrf.mxu0
        %v1034 = vadd.f32 %v951, %v1033
        %v1035 = vand.u32 %v424, 4294901760
        %1036 = vmatmul.f32.gmra.mxu0 %v1035
        %v1037 = vpop.f32.mrf.mxu0
        %v1038 = vadd.f32 %v955, %v1037
        %v1039 = vand.u32 %v427, 4294901760
        %1040 = vmatmul.f32.gmra.mxu0 %v1039
        %v1041 = vpop.f32.mrf.mxu0
        %v1042 = vadd.f32 %v959, %v1041
        %v1043 = vand.u32 %v430, 4294901760
        %1044 = vmatmul.f32.gmra.mxu0 %v1043
        %v1045 = vpop.f32.mrf.mxu0
        %v1046 = vadd.f32 %v963, %v1045
        %v1047 = vand.u32 %v433, 4294901760
        %1048 = vmatmul.f32.gmra.mxu0 %v1047
        %v1049 = vpop.f32.mrf.mxu0
        %v1050 = vadd.f32 %v967, %v1049
        %v1051 = vand.u32 %v436, 4294901760
        %1052 = vmatmul.f32.gmra.mxu0 %v1051
        %v1053 = vpop.f32.mrf.mxu0
        %v1054 = vadd.f32 %v971, %v1053
        %v1055 = vand.u32 %v439, 4294901760
        %1056 = vmatmul.f32.gmra.mxu0 %v1055
        %v1057 = vpop.f32.mrf.mxu0
        %v1058 = vadd.f32 %v975, %v1057
        %v1059 = vand.u32 %v442, 4294901760
        %1060 = vmatmul.f32.gmra.mxu0 %v1059
        %v1061 = vpop.f32.mrf.mxu0
        %v1062 = vadd.f32 %v979, %v1061
        %v1063 = vand.u32 %v445, 4294901760
        %1064 = vmatmul.f32.gmra.mxu0 %v1063
        %v1065 = vpop.f32.mrf.mxu0
        %v1066 = vadd.f32 %v983, %v1065
        %v1067 = vand.u32 %v448, 4294901760
        %1068 = vmatmul.f32.gmra.mxu0 %v1067
        %v1069 = vpop.f32.mrf.mxu0
        %v1070 = vadd.f32 %v987, %v1069
        %v1071 = vand.u32 %v451, 4294901760
        %1072 = vmatmul.f32.gmra.mxu0 %v1071
        %v1073 = vpop.f32.mrf.mxu0
        %v1074 = vadd.f32 %v991, %v1073
        %v1075 = vand.u32 %v454, 4294901760
        %1076 = vmatmul.f32.gmra.mxu0 %v1075
        %v1077 = vpop.f32.mrf.mxu0
        %v1078 = vadd.f32 %v995, %v1077
        %1079 = vdwg.mxu0
        %v1080 = vmax.f32 %v1018, 0.0
        %v1081 = vmax.f32 %v1022, 0.0
        %v1082 = vmax.f32 %v1026, 0.0
        %v1083 = vmax.f32 %v1030, 0.0
        %v1084 = vmax.f32 %v1034, 0.0
        %v1085 = vmax.f32 %v1038, 0.0
        %v1086 = vmax.f32 %v1042, 0.0
        %v1087 = vmax.f32 %v1046, 0.0
        %v1088 = vmax.f32 %v1050, 0.0
        %v1089 = vmax.f32 %v1054, 0.0
        %v1090 = vmax.f32 %v1058, 0.0
        %v1091 = vmax.f32 %v1062, 0.0
        %v1092 = vmax.f32 %v1066, 0.0
        %v1093 = vmax.f32 %v1070, 0.0
        %v1094 = vmax.f32 %v1074, 0.0
        %v1095 = vmax.f32 %v1078, 0.0
        %v1096 = vand.u32 2147483647, %v1018
        %v1097 = vand.u32 2147483647, %v1022
        %v1098 = vand.u32 2147483647, %v1026
        %v1099 = vand.u32 2147483647, %v1030
        %v1100 = vand.u32 2147483647, %v1034
        %v1101 = vand.u32 2147483647, %v1038
        %v1102 = vand.u32 2147483647, %v1042
        %v1103 = vand.u32 2147483647, %v1046
        %v1104 = vand.u32 2147483647, %v1050
        %v1105 = vand.u32 2147483647, %v1054
        %v1106 = vand.u32 2147483647, %v1058
        %v1107 = vand.u32 2147483647, %v1062
        %v1108 = vand.u32 2147483647, %v1066
        %v1109 = vand.u32 2147483647, %v1070
        %v1110 = vand.u32 2147483647, %v1074
        %v1111 = vand.u32 2147483647, %v1078
        %v1112 = vsub.f32 0.0, %v1096
        %v1113 = vsub.f32 0.0, %v1097
        %v1114 = vsub.f32 0.0, %v1098
        %v1115 = vsub.f32 0.0, %v1099
        %v1116 = vsub.f32 0.0, %v1100
        %v1117 = vsub.f32 0.0, %v1101
        %v1118 = vsub.f32 0.0, %v1102
        %v1119 = vsub.f32 0.0, %v1103
        %v1120 = vsub.f32 0.0, %v1104
        %v1121 = vsub.f32 0.0, %v1105
        %v1122 = vsub.f32 0.0, %v1106
        %v1123 = vsub.f32 0.0, %v1107
        %v1124 = vsub.f32 0.0, %v1108
        %v1125 = vsub.f32 0.0, %v1109
        %v1126 = vsub.f32 0.0, %v1110
        %v1127 = vsub.f32 0.0, %v1111
        %v1128 = vmul.f32 %v1112, 1.442695
        %v1129 = vpow.pop %v1128
        %v1130 = vmul.f32 %v1113, 1.442695
        %v1131 = vpow.pop %v1130
        %v1132 = vmul.f32 %v1114, 1.442695
        %v1133 = vpow.pop %v1132
        %v1134 = vmul.f32 %v1115, 1.442695
        %v1135 = vpow.pop %v1134
        %v1136 = vmul.f32 %v1116, 1.442695
        %v1137 = vpow.pop %v1136
        %v1138 = vmul.f32 %v1117, 1.442695
        %v1139 = vpow.pop %v1138
        %v1140 = vmul.f32 %v1118, 1.442695
        %v1141 = vpow.pop %v1140
        %v1142 = vmul.f32 %v1119, 1.442695
        %v1143 = vpow.pop %v1142
        %v1144 = vmul.f32 %v1120, 1.442695
        %v1145 = vpow.pop %v1144
        %v1146 = vmul.f32 %v1121, 1.442695
        %v1147 = vpow.pop %v1146
        %v1148 = vmul.f32 %v1122, 1.442695
        %v1149 = vpow.pop %v1148
        %v1150 = vmul.f32 %v1123, 1.442695
        %v1151 = vpow.pop %v1150
        %v1152 = vmul.f32 %v1124, 1.442695
        %v1153 = vpow.pop %v1152
        %v1154 = vmul.f32 %v1125, 1.442695
        %v1155 = vpow.pop %v1154
        %v1156 = vmul.f32 %v1126, 1.442695
        %v1157 = vpow.pop %v1156
        %v1158 = vmul.f32 %v1127, 1.442695
        %v1159 = vpow.pop %v1158
        %v1160 = vadd.f32 %v1129, 1.0
        %v1161 = vlog2.pop %v1160
        %v1162 = vmul.f32 %v1161, 0.6931472
        %v1163 = vmul.f32 -0.5, %v1129
        %v1164 = vadd.f32 %v1163, 1.0
        %v1165 = vmul.f32 %v1164, %v1129
        %v1166 = vand.u32 2147483647, %v1129
        %vm1167 = vcmp.lt.f32.partialorder %v1166, 0.0004427343
        %v1168 = vsel %vm1167, %v1165, %v1162
        %v1169 = vadd.f32 %v1131, 1.0
        %v1170 = vlog2.pop %v1169
        %v1171 = vmul.f32 %v1170, 0.6931472
        %v1172 = vmul.f32 -0.5, %v1131
        %v1173 = vadd.f32 %v1172, 1.0
        %v1174 = vmul.f32 %v1173, %v1131
        %v1175 = vand.u32 2147483647, %v1131
        %vm1176 = vcmp.lt.f32.partialorder %v1175, 0.0004427343
        %v1177 = vsel %vm1176, %v1174, %v1171
        %v1178 = vadd.f32 %v1133, 1.0
        %v1179 = vlog2.pop %v1178
        %v1180 = vmul.f32 %v1179, 0.6931472
        %v1181 = vmul.f32 -0.5, %v1133
        %v1182 = vadd.f32 %v1181, 1.0
        %v1183 = vmul.f32 %v1182, %v1133
        %v1184 = vand.u32 2147483647, %v1133
        %vm1185 = vcmp.lt.f32.partialorder %v1184, 0.0004427343
        %v1186 = vsel %vm1185, %v1183, %v1180
        %v1187 = vadd.f32 %v1135, 1.0
        %v1188 = vlog2.pop %v1187
        %v1189 = vmul.f32 %v1188, 0.6931472
        %v1190 = vmul.f32 -0.5, %v1135
        %v1191 = vadd.f32 %v1190, 1.0
        %v1192 = vmul.f32 %v1191, %v1135
        %v1193 = vand.u32 2147483647, %v1135
        %vm1194 = vcmp.lt.f32.partialorder %v1193, 0.0004427343
        %v1195 = vsel %vm1194, %v1192, %v1189
        %v1196 = vadd.f32 %v1137, 1.0
        %v1197 = vlog2.pop %v1196
        %v1198 = vmul.f32 %v1197, 0.6931472
        %v1199 = vmul.f32 -0.5, %v1137
        %v1200 = vadd.f32 %v1199, 1.0
        %v1201 = vmul.f32 %v1200, %v1137
        %v1202 = vand.u32 2147483647, %v1137
        %vm1203 = vcmp.lt.f32.partialorder %v1202, 0.0004427343
        %v1204 = vsel %vm1203, %v1201, %v1198
        %v1205 = vadd.f32 %v1139, 1.0
        %v1206 = vlog2.pop %v1205
        %v1207 = vmul.f32 %v1206, 0.6931472
        %v1208 = vmul.f32 -0.5, %v1139
        %v1209 = vadd.f32 %v1208, 1.0
        %v1210 = vmul.f32 %v1209, %v1139
        %v1211 = vand.u32 2147483647, %v1139
        %vm1212 = vcmp.lt.f32.partialorder %v1211, 0.0004427343
        %v1213 = vsel %vm1212, %v1210, %v1207
        %v1214 = vadd.f32 %v1141, 1.0
        %v1215 = vlog2.pop %v1214
        %v1216 = vmul.f32 %v1215, 0.6931472
        %v1217 = vmul.f32 -0.5, %v1141
        %v1218 = vadd.f32 %v1217, 1.0
        %v1219 = vmul.f32 %v1218, %v1141
        %v1220 = vand.u32 2147483647, %v1141
        %vm1221 = vcmp.lt.f32.partialorder %v1220, 0.0004427343
        %v1222 = vsel %vm1221, %v1219, %v1216
        %v1223 = vadd.f32 %v1143, 1.0
        %v1224 = vlog2.pop %v1223
        %v1225 = vmul.f32 %v1224, 0.6931472
        %v1226 = vmul.f32 -0.5, %v1143
        %v1227 = vadd.f32 %v1226, 1.0
        %v1228 = vmul.f32 %v1227, %v1143
        %v1229 = vand.u32 2147483647, %v1143
        %vm1230 = vcmp.lt.f32.partialorder %v1229, 0.0004427343
        %v1231 = vsel %vm1230, %v1228, %v1225
        %v1232 = vadd.f32 %v1145, 1.0
        %v1233 = vlog2.pop %v1232
        %v1234 = vmul.f32 %v1233, 0.6931472
        %v1235 = vmul.f32 -0.5, %v1145
        %v1236 = vadd.f32 %v1235, 1.0
        %v1237 = vmul.f32 %v1236, %v1145
        %v1238 = vand.u32 2147483647, %v1145
        %vm1239 = vcmp.lt.f32.partialorder %v1238, 0.0004427343
        %v1240 = vsel %vm1239, %v1237, %v1234
        %v1241 = vadd.f32 %v1147, 1.0
        %v1242 = vlog2.pop %v1241
        %v1243 = vmul.f32 %v1242, 0.6931472
        %v1244 = vmul.f32 -0.5, %v1147
        %v1245 = vadd.f32 %v1244, 1.0
        %v1246 = vmul.f32 %v1245, %v1147
        %v1247 = vand.u32 2147483647, %v1147
        %vm1248 = vcmp.lt.f32.partialorder %v1247, 0.0004427343
        %v1249 = vsel %vm1248, %v1246, %v1243
        %v1250 = vadd.f32 %v1149, 1.0
        %v1251 = vlog2.pop %v1250
        %v1252 = vmul.f32 %v1251, 0.6931472
        %v1253 = vmul.f32 -0.5, %v1149
        %v1254 = vadd.f32 %v1253, 1.0
        %v1255 = vmul.f32 %v1254, %v1149
        %v1256 = vand.u32 2147483647, %v1149
        %vm1257 = vcmp.lt.f32.partialorder %v1256, 0.0004427343
        %v1258 = vsel %vm1257, %v1255, %v1252
        %v1259 = vadd.f32 %v1151, 1.0
        %v1260 = vlog2.pop %v1259
        %v1261 = vmul.f32 %v1260, 0.6931472
        %v1262 = vmul.f32 -0.5, %v1151
        %v1263 = vadd.f32 %v1262, 1.0
        %v1264 = vmul.f32 %v1263, %v1151
        %v1265 = vand.u32 2147483647, %v1151
        %vm1266 = vcmp.lt.f32.partialorder %v1265, 0.0004427343
        %v1267 = vsel %vm1266, %v1264, %v1261
        %v1268 = vadd.f32 %v1153, 1.0
        %v1269 = vlog2.pop %v1268
        %v1270 = vmul.f32 %v1269, 0.6931472
        %v1271 = vmul.f32 -0.5, %v1153
        %v1272 = vadd.f32 %v1271, 1.0
        %v1273 = vmul.f32 %v1272, %v1153
        %v1274 = vand.u32 2147483647, %v1153
        %vm1275 = vcmp.lt.f32.partialorder %v1274, 0.0004427343
        %v1276 = vsel %vm1275, %v1273, %v1270
        %v1277 = vadd.f32 %v1155, 1.0
        %v1278 = vlog2.pop %v1277
        %v1279 = vmul.f32 %v1278, 0.6931472
        %v1280 = vmul.f32 -0.5, %v1155
        %v1281 = vadd.f32 %v1280, 1.0
        %v1282 = vmul.f32 %v1281, %v1155
        %v1283 = vand.u32 2147483647, %v1155
        %vm1284 = vcmp.lt.f32.partialorder %v1283, 0.0004427343
        %v1285 = vsel %vm1284, %v1282, %v1279
        %v1286 = vadd.f32 %v1157, 1.0
        %v1287 = vlog2.pop %v1286
        %v1288 = vmul.f32 %v1287, 0.6931472
        %v1289 = vmul.f32 -0.5, %v1157
        %v1290 = vadd.f32 %v1289, 1.0
        %v1291 = vmul.f32 %v1290, %v1157
        %v1292 = vand.u32 2147483647, %v1157
        %vm1293 = vcmp.lt.f32.partialorder %v1292, 0.0004427343
        %v1294 = vsel %vm1293, %v1291, %v1288
        %v1295 = vadd.f32 %v1159, 1.0
        %v1296 = vlog2.pop %v1295
        %v1297 = vmul.f32 %v1296, 0.6931472
        %v1298 = vmul.f32 -0.5, %v1159
        %v1299 = vadd.f32 %v1298, 1.0
        %v1300 = vmul.f32 %v1299, %v1159
        %v1301 = vand.u32 2147483647, %v1159
        %vm1302 = vcmp.lt.f32.partialorder %v1301, 0.0004427343
        %v1303 = vsel %vm1302, %v1300, %v1297
        %v1304 = vadd.f32 %v1080, %v1168
        %v1305 = vadd.f32 %v1081, %v1177
        %v1306 = vadd.f32 %v1082, %v1186
        %v1307 = vadd.f32 %v1083, %v1195
        %v1308 = vadd.f32 %v1084, %v1204
        %v1309 = vadd.f32 %v1085, %v1213
        %v1310 = vadd.f32 %v1086, %v1222
        %v1311 = vadd.f32 %v1087, %v1231
        %v1312 = vadd.f32 %v1088, %v1240
        %v1313 = vadd.f32 %v1089, %v1249
        %v1314 = vadd.f32 %v1090, %v1258
        %v1315 = vadd.f32 %v1091, %v1267
        %v1316 = vadd.f32 %v1092, %v1276
        %v1317 = vadd.f32 %v1093, %v1285
        %v1318 = vadd.f32 %v1094, %v1294
        %v1319 = vadd.f32 %v1095, %v1303
        %v1320 = vsub.f32 %v1304, 0.6931472
        %v1321 = vsub.f32 %v1305, 0.6931472
        %v1322 = vsub.f32 %v1306, 0.6931472
        %v1323 = vsub.f32 %v1307, 0.6931472
        %v1324 = vsub.f32 %v1308, 0.6931472
        %v1325 = vsub.f32 %v1309, 0.6931472
        %v1326 = vsub.f32 %v1310, 0.6931472
        %v1327 = vsub.f32 %v1311, 0.6931472
        %v1328 = vsub.f32 %v1312, 0.6931472
        %v1329 = vsub.f32 %v1313, 0.6931472
        %v1330 = vsub.f32 %v1314, 0.6931472
        %v1331 = vsub.f32 %v1315, 0.6931472
        %v1332 = vsub.f32 %v1316, 0.6931472
        %v1333 = vsub.f32 %v1317, 0.6931472
        %v1334 = vsub.f32 %v1318, 0.6931472
        %v1335 = vsub.f32 %v1319, 0.6931472
        %v1336 = vld [vmem:[#allocation2] sm:$0xff]
        %v1337 = vld [vmem:[#allocation2 + $0x8] sm:$0xff]
        %v1338 = vld [vmem:[#allocation2 + $0x10] sm:$0xff]
        %v1339 = vld [vmem:[#allocation2 + $0x18] sm:$0xff]
        %v1340 = vld [vmem:[#allocation2 + $0x20] sm:$0xff]
        %v1341 = vld [vmem:[#allocation2 + $0x28] sm:$0xff]
        %v1342 = vld [vmem:[#allocation2 + $0x30] sm:$0xff]
        %v1343 = vld [vmem:[#allocation2 + $0x38] sm:$0xff]
        %v1344 = vld [vmem:[#allocation2 + $0x40] sm:$0xff]
        %v1345 = vld [vmem:[#allocation2 + $0x48] sm:$0xff]
        %v1346 = vld [vmem:[#allocation2 + $0x50] sm:$0xff]
        %v1347 = vld [vmem:[#allocation2 + $0x58] sm:$0xff]
        %v1348 = vld [vmem:[#allocation2 + $0x60] sm:$0xff]
        %v1349 = vld [vmem:[#allocation2 + $0x68] sm:$0xff]
        %v1350 = vld [vmem:[#allocation2 + $0x70] sm:$0xff]
        %v1351 = vld [vmem:[#allocation2 + $0x78] sm:$0xff]
        %v1352 = vld [vmem:[%s6] sm:$0x1]
        %v1354 = vperm.slane %v1352, 0
        %v1356 = vand.u32 %v1351, 4294901760
        %1357 = vmatpush.msra.mxu0 %v1356
        %v1358 = vand.u32 %v1350, 4294901760
        %1359 = vmatpush.msra.mxu0 %v1358
        %v1360 = vand.u32 %v1349, 4294901760
        %1361 = vmatpush.msra.mxu0 %v1360
        %v1362 = vand.u32 %v1348, 4294901760
        %1363 = vmatpush.msra.mxu0 %v1362
        %v1364 = vand.u32 %v1347, 4294901760
        %1365 = vmatpush.msra.mxu0 %v1364
        %v1366 = vand.u32 %v1346, 4294901760
        %1367 = vmatpush.msra.mxu0 %v1366
        %v1368 = vand.u32 %v1345, 4294901760
        %1369 = vmatpush.msra.mxu0 %v1368
        %v1370 = vand.u32 %v1344, 4294901760
        %1371 = vmatpush.msra.mxu0 %v1370
        %v1372 = vand.u32 %v1343, 4294901760
        %1373 = vmatpush.msra.mxu0 %v1372
        %v1374 = vand.u32 %v1342, 4294901760
        %1375 = vmatpush.msra.mxu0 %v1374
        %v1376 = vand.u32 %v1341, 4294901760
        %1377 = vmatpush.msra.mxu0 %v1376
        %v1378 = vand.u32 %v1340, 4294901760
        %1379 = vmatpush.msra.mxu0 %v1378
        %v1380 = vand.u32 %v1339, 4294901760
        %1381 = vmatpush.msra.mxu0 %v1380
        %v1382 = vand.u32 %v1338, 4294901760
        %1383 = vmatpush.msra.mxu0 %v1382
        %v1384 = vand.u32 %v1337, 4294901760
        %1385 = vmatpush.msra.mxu0 %v1384
        %v1386 = vand.u32 %v1336, 4294901760
        %1387 = vmatpush.msra.mxu0 %v1386
        %v1388 = vand.u32 %v1320, 4294901760
        %v1389 = vsub.f32 %v1320, %v1388
        %v1390 = vand.u32 %v1389, 4294901760
        %v1391 = vsub.f32 %v1389, %v1390
        %v1392 = vand.u32 %v1391, 4294901760
        %1393 = vmatmul.f32.gmra.mxu0 %v1392
        %v1394 = vpop.f32.mrf.mxu0
        %v1395 = vadd.f32 %v1354, %v1394
        %v1396 = vand.u32 %v1321, 4294901760
        %v1397 = vsub.f32 %v1321, %v1396
        %v1398 = vand.u32 %v1397, 4294901760
        %v1399 = vsub.f32 %v1397, %v1398
        %v1400 = vand.u32 %v1399, 4294901760
        %1401 = vmatmul.f32.gmra.mxu0 %v1400
        %v1402 = vpop.f32.mrf.mxu0
        %v1403 = vadd.f32 %v1354, %v1402
        %v1404 = vand.u32 %v1322, 4294901760
        %v1405 = vsub.f32 %v1322, %v1404
        %v1406 = vand.u32 %v1405, 4294901760
        %v1407 = vsub.f32 %v1405, %v1406
        %v1408 = vand.u32 %v1407, 4294901760
        %1409 = vmatmul.f32.gmra.mxu0 %v1408
        %v1410 = vpop.f32.mrf.mxu0
        %v1411 = vadd.f32 %v1354, %v1410
        %v1412 = vand.u32 %v1323, 4294901760
        %v1413 = vsub.f32 %v1323, %v1412
        %v1414 = vand.u32 %v1413, 4294901760
        %v1415 = vsub.f32 %v1413, %v1414
        %v1416 = vand.u32 %v1415, 4294901760
        %1417 = vmatmul.f32.gmra.mxu0 %v1416
        %v1418 = vpop.f32.mrf.mxu0
        %v1419 = vadd.f32 %v1354, %v1418
        %v1420 = vand.u32 %v1324, 4294901760
        %v1421 = vsub.f32 %v1324, %v1420
        %v1422 = vand.u32 %v1421, 4294901760
        %v1423 = vsub.f32 %v1421, %v1422
        %v1424 = vand.u32 %v1423, 4294901760
        %1425 = vmatmul.f32.gmra.mxu0 %v1424
        %v1426 = vpop.f32.mrf.mxu0
        %v1427 = vadd.f32 %v1354, %v1426
        %v1428 = vand.u32 %v1325, 4294901760
        %v1429 = vsub.f32 %v1325, %v1428
        %v1430 = vand.u32 %v1429, 4294901760
        %v1431 = vsub.f32 %v1429, %v1430
        %v1432 = vand.u32 %v1431, 4294901760
        %1433 = vmatmul.f32.gmra.mxu0 %v1432
        %v1434 = vpop.f32.mrf.mxu0
        %v1435 = vadd.f32 %v1354, %v1434
        %v1436 = vand.u32 %v1326, 4294901760
        %v1437 = vsub.f32 %v1326, %v1436
        %v1438 = vand.u32 %v1437, 4294901760
        %v1439 = vsub.f32 %v1437, %v1438
        %v1440 = vand.u32 %v1439, 4294901760
        %1441 = vmatmul.f32.gmra.mxu0 %v1440
        %v1442 = vpop.f32.mrf.mxu0
        %v1443 = vadd.f32 %v1354, %v1442
        %v1444 = vand.u32 %v1327, 4294901760
        %v1445 = vsub.f32 %v1327, %v1444
        %v1446 = vand.u32 %v1445, 4294901760
        %v1447 = vsub.f32 %v1445, %v1446
        %v1448 = vand.u32 %v1447, 4294901760
        %1449 = vmatmul.f32.gmra.mxu0 %v1448
        %v1450 = vpop.f32.mrf.mxu0
        %v1451 = vadd.f32 %v1354, %v1450
        %v1452 = vand.u32 %v1328, 4294901760
        %v1453 = vsub.f32 %v1328, %v1452
        %v1454 = vand.u32 %v1453, 4294901760
        %v1455 = vsub.f32 %v1453, %v1454
        %v1456 = vand.u32 %v1455, 4294901760
        %1457 = vmatmul.f32.gmra.mxu0 %v1456
        %v1458 = vpop.f32.mrf.mxu0
        %v1459 = vadd.f32 %v1354, %v1458
        %v1460 = vand.u32 %v1329, 4294901760
        %v1461 = vsub.f32 %v1329, %v1460
        %v1462 = vand.u32 %v1461, 4294901760
        %v1463 = vsub.f32 %v1461, %v1462
        %v1464 = vand.u32 %v1463, 4294901760
        %1465 = vmatmul.f32.gmra.mxu0 %v1464
        %v1466 = vpop.f32.mrf.mxu0
        %v1467 = vadd.f32 %v1354, %v1466
        %v1468 = vand.u32 %v1330, 4294901760
        %v1469 = vsub.f32 %v1330, %v1468
        %v1470 = vand.u32 %v1469, 4294901760
        %v1471 = vsub.f32 %v1469, %v1470
        %v1472 = vand.u32 %v1471, 4294901760
        %1473 = vmatmul.f32.gmra.mxu0 %v1472
        %v1474 = vpop.f32.mrf.mxu0
        %v1475 = vadd.f32 %v1354, %v1474
        %v1476 = vand.u32 %v1331, 4294901760
        %v1477 = vsub.f32 %v1331, %v1476
        %v1478 = vand.u32 %v1477, 4294901760
        %v1479 = vsub.f32 %v1477, %v1478
        %v1480 = vand.u32 %v1479, 4294901760
        %1481 = vmatmul.f32.gmra.mxu0 %v1480
        %v1482 = vpop.f32.mrf.mxu0
        %v1483 = vadd.f32 %v1354, %v1482
        %v1484 = vand.u32 %v1332, 4294901760
        %v1485 = vsub.f32 %v1332, %v1484
        %v1486 = vand.u32 %v1485, 4294901760
        %v1487 = vsub.f32 %v1485, %v1486
        %v1488 = vand.u32 %v1487, 4294901760
        %1489 = vmatmul.f32.gmra.mxu0 %v1488
        %v1490 = vpop.f32.mrf.mxu0
        %v1491 = vadd.f32 %v1354, %v1490
        %v1492 = vand.u32 %v1333, 4294901760
        %v1493 = vsub.f32 %v1333, %v1492
        %v1494 = vand.u32 %v1493, 4294901760
        %v1495 = vsub.f32 %v1493, %v1494
        %v1496 = vand.u32 %v1495, 4294901760
        %1497 = vmatmul.f32.gmra.mxu0 %v1496
        %v1498 = vpop.f32.mrf.mxu0
        %v1499 = vadd.f32 %v1354, %v1498
        %v1500 = vand.u32 %v1334, 4294901760
        %v1501 = vsub.f32 %v1334, %v1500
        %v1502 = vand.u32 %v1501, 4294901760
        %v1503 = vsub.f32 %v1501, %v1502
        %v1504 = vand.u32 %v1503, 4294901760
        %1505 = vmatmul.f32.gmra.mxu0 %v1504
        %v1506 = vpop.f32.mrf.mxu0
        %v1507 = vadd.f32 %v1354, %v1506
        %v1508 = vand.u32 %v1335, 4294901760
        %v1509 = vsub.f32 %v1335, %v1508
        %v1510 = vand.u32 %v1509, 4294901760
        %v1511 = vsub.f32 %v1509, %v1510
        %v1512 = vand.u32 %v1511, 4294901760
        %1513 = vmatmul.f32.gmra.mxu0 %v1512
        %v1514 = vpop.f32.mrf.mxu0
        %v1515 = vadd.f32 %v1354, %v1514
        %1516 = vdwg.mxu0
        %v1517 = vand.u32 %v1351, 4294901760
        %v1518 = vsub.f32 %v1351, %v1517
        %v1519 = vand.u32 %v1518, 4294901760
        %v1520 = vsub.f32 %v1518, %v1519
        %v1521 = vand.u32 %v1520, 4294901760
        %1522 = vmatpush.msra.mxu0 %v1521
        %v1523 = vand.u32 %v1350, 4294901760
        %v1524 = vsub.f32 %v1350, %v1523
        %v1525 = vand.u32 %v1524, 4294901760
        %v1526 = vsub.f32 %v1524, %v1525
        %v1527 = vand.u32 %v1526, 4294901760
        %1528 = vmatpush.msra.mxu0 %v1527
        %v1529 = vand.u32 %v1349, 4294901760
        %v1530 = vsub.f32 %v1349, %v1529
        %v1531 = vand.u32 %v1530, 4294901760
        %v1532 = vsub.f32 %v1530, %v1531
        %v1533 = vand.u32 %v1532, 4294901760
        %1534 = vmatpush.msra.mxu0 %v1533
        %v1535 = vand.u32 %v1348, 4294901760
        %v1536 = vsub.f32 %v1348, %v1535
        %v1537 = vand.u32 %v1536, 4294901760
        %v1538 = vsub.f32 %v1536, %v1537
        %v1539 = vand.u32 %v1538, 4294901760
        %1540 = vmatpush.msra.mxu0 %v1539
        %v1541 = vand.u32 %v1347, 4294901760
        %v1542 = vsub.f32 %v1347, %v1541
        %v1543 = vand.u32 %v1542, 4294901760
        %v1544 = vsub.f32 %v1542, %v1543
        %v1545 = vand.u32 %v1544, 4294901760
        %1546 = vmatpush.msra.mxu0 %v1545
        %v1547 = vand.u32 %v1346, 4294901760
        %v1548 = vsub.f32 %v1346, %v1547
        %v1549 = vand.u32 %v1548, 4294901760
        %v1550 = vsub.f32 %v1548, %v1549
        %v1551 = vand.u32 %v1550, 4294901760
        %1552 = vmatpush.msra.mxu0 %v1551
        %v1553 = vand.u32 %v1345, 4294901760
        %v1554 = vsub.f32 %v1345, %v1553
        %v1555 = vand.u32 %v1554, 4294901760
        %v1556 = vsub.f32 %v1554, %v1555
        %v1557 = vand.u32 %v1556, 4294901760
        %1558 = vmatpush.msra.mxu0 %v1557
        %v1559 = vand.u32 %v1344, 4294901760
        %v1560 = vsub.f32 %v1344, %v1559
        %v1561 = vand.u32 %v1560, 4294901760
        %v1562 = vsub.f32 %v1560, %v1561
        %v1563 = vand.u32 %v1562, 4294901760
        %1564 = vmatpush.msra.mxu0 %v1563
        %v1565 = vand.u32 %v1343, 4294901760
        %v1566 = vsub.f32 %v1343, %v1565
        %v1567 = vand.u32 %v1566, 4294901760
        %v1568 = vsub.f32 %v1566, %v1567
        %v1569 = vand.u32 %v1568, 4294901760
        %1570 = vmatpush.msra.mxu0 %v1569
        %v1571 = vand.u32 %v1342, 4294901760
        %v1572 = vsub.f32 %v1342, %v1571
        %v1573 = vand.u32 %v1572, 4294901760
        %v1574 = vsub.f32 %v1572, %v1573
        %v1575 = vand.u32 %v1574, 4294901760
        %1576 = vmatpush.msra.mxu0 %v1575
        %v1577 = vand.u32 %v1341, 4294901760
        %v1578 = vsub.f32 %v1341, %v1577
        %v1579 = vand.u32 %v1578, 4294901760
        %v1580 = vsub.f32 %v1578, %v1579
        %v1581 = vand.u32 %v1580, 4294901760
        %1582 = vmatpush.msra.mxu0 %v1581
        %v1583 = vand.u32 %v1340, 4294901760
        %v1584 = vsub.f32 %v1340, %v1583
        %v1585 = vand.u32 %v1584, 4294901760
        %v1586 = vsub.f32 %v1584, %v1585
        %v1587 = vand.u32 %v1586, 4294901760
        %1588 = vmatpush.msra.mxu0 %v1587
        %v1589 = vand.u32 %v1339, 4294901760
        %v1590 = vsub.f32 %v1339, %v1589
        %v1591 = vand.u32 %v1590, 4294901760
        %v1592 = vsub.f32 %v1590, %v1591
        %v1593 = vand.u32 %v1592, 4294901760
        %1594 = vmatpush.msra.mxu0 %v1593
        %v1595 = vand.u32 %v1338, 4294901760
        %v1596 = vsub.f32 %v1338, %v1595
        %v1597 = vand.u32 %v1596, 4294901760
        %v1598 = vsub.f32 %v1596, %v1597
        %v1599 = vand.u32 %v1598, 4294901760
        %1600 = vmatpush.msra.mxu0 %v1599
        %v1601 = vand.u32 %v1337, 4294901760
        %v1602 = vsub.f32 %v1337, %v1601
        %v1603 = vand.u32 %v1602, 4294901760
        %v1604 = vsub.f32 %v1602, %v1603
        %v1605 = vand.u32 %v1604, 4294901760
        %1606 = vmatpush.msra.mxu0 %v1605
        %v1607 = vand.u32 %v1336, 4294901760
        %v1608 = vsub.f32 %v1336, %v1607
        %v1609 = vand.u32 %v1608, 4294901760
        %v1610 = vsub.f32 %v1608, %v1609
        %v1611 = vand.u32 %v1610, 4294901760
        %1612 = vmatpush.msra.mxu0 %v1611
        %v1613 = vand.u32 %v1320, 4294901760
        %1614 = vmatmul.f32.gmra.mxu0 %v1613
        %v1615 = vpop.f32.mrf.mxu0
        %v1616 = vadd.f32 %v1395, %v1615
        %v1617 = vand.u32 %v1321, 4294901760
        %1618 = vmatmul.f32.gmra.mxu0 %v1617
        %v1619 = vpop.f32.mrf.mxu0
        %v1620 = vadd.f32 %v1403, %v1619
        %v1621 = vand.u32 %v1322, 4294901760
        %1622 = vmatmul.f32.gmra.mxu0 %v1621
        %v1623 = vpop.f32.mrf.mxu0
        %v1624 = vadd.f32 %v1411, %v1623
        %v1625 = vand.u32 %v1323, 4294901760
        %1626 = vmatmul.f32.gmra.mxu0 %v1625
        %v1627 = vpop.f32.mrf.mxu0
        %v1628 = vadd.f32 %v1419, %v1627
        %v1629 = vand.u32 %v1324, 4294901760
        %1630 = vmatmul.f32.gmra.mxu0 %v1629
        %v1631 = vpop.f32.mrf.mxu0
        %v1632 = vadd.f32 %v1427, %v1631
        %v1633 = vand.u32 %v1325, 4294901760
        %1634 = vmatmul.f32.gmra.mxu0 %v1633
        %v1635 = vpop.f32.mrf.mxu0
        %v1636 = vadd.f32 %v1435, %v1635
        %v1637 = vand.u32 %v1326, 4294901760
        %1638 = vmatmul.f32.gmra.mxu0 %v1637
        %v1639 = vpop.f32.mrf.mxu0
        %v1640 = vadd.f32 %v1443, %v1639
        %v1641 = vand.u32 %v1327, 4294901760
        %1642 = vmatmul.f32.gmra.mxu0 %v1641
        %v1643 = vpop.f32.mrf.mxu0
        %v1644 = vadd.f32 %v1451, %v1643
        %v1645 = vand.u32 %v1328, 4294901760
        %1646 = vmatmul.f32.gmra.mxu0 %v1645
        %v1647 = vpop.f32.mrf.mxu0
        %v1648 = vadd.f32 %v1459, %v1647
        %v1649 = vand.u32 %v1329, 4294901760
        %1650 = vmatmul.f32.gmra.mxu0 %v1649
        %v1651 = vpop.f32.mrf.mxu0
        %v1652 = vadd.f32 %v1467, %v1651
        %v1653 = vand.u32 %v1330, 4294901760
        %1654 = vmatmul.f32.gmra.mxu0 %v1653
        %v1655 = vpop.f32.mrf.mxu0
        %v1656 = vadd.f32 %v1475, %v1655
        %v1657 = vand.u32 %v1331, 4294901760
        %1658 = vmatmul.f32.gmra.mxu0 %v1657
        %v1659 = vpop.f32.mrf.mxu0
        %v1660 = vadd.f32 %v1483, %v1659
        %v1661 = vand.u32 %v1332, 4294901760
        %1662 = vmatmul.f32.gmra.mxu0 %v1661
        %v1663 = vpop.f32.mrf.mxu0
        %v1664 = vadd.f32 %v1491, %v1663
        %v1665 = vand.u32 %v1333, 4294901760
        %1666 = vmatmul.f32.gmra.mxu0 %v1665
        %v1667 = vpop.f32.mrf.mxu0
        %v1668 = vadd.f32 %v1499, %v1667
        %v1669 = vand.u32 %v1334, 4294901760
        %1670 = vmatmul.f32.gmra.mxu0 %v1669
        %v1671 = vpop.f32.mrf.mxu0
        %v1672 = vadd.f32 %v1507, %v1671
        %v1673 = vand.u32 %v1335, 4294901760
        %1674 = vmatmul.f32.gmra.mxu0 %v1673
        %v1675 = vpop.f32.mrf.mxu0
        %v1676 = vadd.f32 %v1515, %v1675
        %1677 = vdwg.mxu0
        %v1678 = vand.u32 %v1351, 4294901760
        %v1679 = vsub.f32 %v1351, %v1678
        %1680 = vmatpush.msra.mxu0 %v1679
        %v1681 = vand.u32 %v1350, 4294901760
        %v1682 = vsub.f32 %v1350, %v1681
        %1683 = vmatpush.msra.mxu0 %v1682
        %v1684 = vand.u32 %v1349, 4294901760
        %v1685 = vsub.f32 %v1349, %v1684
        %1686 = vmatpush.msra.mxu0 %v1685
        %v1687 = vand.u32 %v1348, 4294901760
        %v1688 = vsub.f32 %v1348, %v1687
        %1689 = vmatpush.msra.mxu0 %v1688
        %v1690 = vand.u32 %v1347, 4294901760
        %v1691 = vsub.f32 %v1347, %v1690
        %1692 = vmatpush.msra.mxu0 %v1691
        %v1693 = vand.u32 %v1346, 4294901760
        %v1694 = vsub.f32 %v1346, %v1693
        %1695 = vmatpush.msra.mxu0 %v1694
        %v1696 = vand.u32 %v1345, 4294901760
        %v1697 = vsub.f32 %v1345, %v1696
        %1698 = vmatpush.msra.mxu0 %v1697
        %v1699 = vand.u32 %v1344, 4294901760
        %v1700 = vsub.f32 %v1344, %v1699
        %1701 = vmatpush.msra.mxu0 %v1700
        %v1702 = vand.u32 %v1343, 4294901760
        %v1703 = vsub.f32 %v1343, %v1702
        %1704 = vmatpush.msra.mxu0 %v1703
        %v1705 = vand.u32 %v1342, 4294901760
        %v1706 = vsub.f32 %v1342, %v1705
        %1707 = vmatpush.msra.mxu0 %v1706
        %v1708 = vand.u32 %v1341, 4294901760
        %v1709 = vsub.f32 %v1341, %v1708
        %1710 = vmatpush.msra.mxu0 %v1709
        %v1711 = vand.u32 %v1340, 4294901760
        %v1712 = vsub.f32 %v1340, %v1711
        %1713 = vmatpush.msra.mxu0 %v1712
        %v1714 = vand.u32 %v1339, 4294901760
        %v1715 = vsub.f32 %v1339, %v1714
        %1716 = vmatpush.msra.mxu0 %v1715
        %v1717 = vand.u32 %v1338, 4294901760
        %v1718 = vsub.f32 %v1338, %v1717
        %1719 = vmatpush.msra.mxu0 %v1718
        %v1720 = vand.u32 %v1337, 4294901760
        %v1721 = vsub.f32 %v1337, %v1720
        %1722 = vmatpush.msra.mxu0 %v1721
        %v1723 = vand.u32 %v1336, 4294901760
        %v1724 = vsub.f32 %v1336, %v1723
        %1725 = vmatpush.msra.mxu0 %v1724
        %v1726 = vand.u32 %v1320, 4294901760
        %v1727 = vsub.f32 %v1320, %v1726
        %1728 = vmatmul.f32.gmra.mxu0 %v1727
        %v1729 = vpop.f32.mrf.mxu0
        %v1730 = vadd.f32 %v1616, %v1729
        %v1731 = vand.u32 %v1321, 4294901760
        %v1732 = vsub.f32 %v1321, %v1731
        %1733 = vmatmul.f32.gmra.mxu0 %v1732
        %v1734 = vpop.f32.mrf.mxu0
        %v1735 = vadd.f32 %v1620, %v1734
        %v1736 = vand.u32 %v1322, 4294901760
        %v1737 = vsub.f32 %v1322, %v1736
        %1738 = vmatmul.f32.gmra.mxu0 %v1737
        %v1739 = vpop.f32.mrf.mxu0
        %v1740 = vadd.f32 %v1624, %v1739
        %v1741 = vand.u32 %v1323, 4294901760
        %v1742 = vsub.f32 %v1323, %v1741
        %1743 = vmatmul.f32.gmra.mxu0 %v1742
        %v1744 = vpop.f32.mrf.mxu0
        %v1745 = vadd.f32 %v1628, %v1744
        %v1746 = vand.u32 %v1324, 4294901760
        %v1747 = vsub.f32 %v1324, %v1746
        %1748 = vmatmul.f32.gmra.mxu0 %v1747
        %v1749 = vpop.f32.mrf.mxu0
        %v1750 = vadd.f32 %v1632, %v1749
        %v1751 = vand.u32 %v1325, 4294901760
        %v1752 = vsub.f32 %v1325, %v1751
        %1753 = vmatmul.f32.gmra.mxu0 %v1752
        %v1754 = vpop.f32.mrf.mxu0
        %v1755 = vadd.f32 %v1636, %v1754
        %v1756 = vand.u32 %v1326, 4294901760
        %v1757 = vsub.f32 %v1326, %v1756
        %1758 = vmatmul.f32.gmra.mxu0 %v1757
        %v1759 = vpop.f32.mrf.mxu0
        %v1760 = vadd.f32 %v1640, %v1759
        %v1761 = vand.u32 %v1327, 4294901760
        %v1762 = vsub.f32 %v1327, %v1761
        %1763 = vmatmul.f32.gmra.mxu0 %v1762
        %v1764 = vpop.f32.mrf.mxu0
        %v1765 = vadd.f32 %v1644, %v1764
        %v1766 = vand.u32 %v1328, 4294901760
        %v1767 = vsub.f32 %v1328, %v1766
        %1768 = vmatmul.f32.gmra.mxu0 %v1767
        %v1769 = vpop.f32.mrf.mxu0
        %v1770 = vadd.f32 %v1648, %v1769
        %v1771 = vand.u32 %v1329, 4294901760
        %v1772 = vsub.f32 %v1329, %v1771
        %1773 = vmatmul.f32.gmra.mxu0 %v1772
        %v1774 = vpop.f32.mrf.mxu0
        %v1775 = vadd.f32 %v1652, %v1774
        %v1776 = vand.u32 %v1330, 4294901760
        %v1777 = vsub.f32 %v1330, %v1776
        %1778 = vmatmul.f32.gmra.mxu0 %v1777
        %v1779 = vpop.f32.mrf.mxu0
        %v1780 = vadd.f32 %v1656, %v1779
        %v1781 = vand.u32 %v1331, 4294901760
        %v1782 = vsub.f32 %v1331, %v1781
        %1783 = vmatmul.f32.gmra.mxu0 %v1782
        %v1784 = vpop.f32.mrf.mxu0
        %v1785 = vadd.f32 %v1660, %v1784
        %v1786 = vand.u32 %v1332, 4294901760
        %v1787 = vsub.f32 %v1332, %v1786
        %1788 = vmatmul.f32.gmra.mxu0 %v1787
        %v1789 = vpop.f32.mrf.mxu0
        %v1790 = vadd.f32 %v1664, %v1789
        %v1791 = vand.u32 %v1333, 4294901760
        %v1792 = vsub.f32 %v1333, %v1791
        %1793 = vmatmul.f32.gmra.mxu0 %v1792
        %v1794 = vpop.f32.mrf.mxu0
        %v1795 = vadd.f32 %v1668, %v1794
        %v1796 = vand.u32 %v1334, 4294901760
        %v1797 = vsub.f32 %v1334, %v1796
        %1798 = vmatmul.f32.gmra.mxu0 %v1797
        %v1799 = vpop.f32.mrf.mxu0
        %v1800 = vadd.f32 %v1672, %v1799
        %v1801 = vand.u32 %v1335, 4294901760
        %v1802 = vsub.f32 %v1335, %v1801
        %1803 = vmatmul.f32.gmra.mxu0 %v1802
        %v1804 = vpop.f32.mrf.mxu0
        %v1805 = vadd.f32 %v1676, %v1804
        %1806 = vdwg.mxu0
        %v1807 = vand.u32 %v1351, 4294901760
        %1808 = vmatpush.msra.mxu0 %v1807
        %v1809 = vand.u32 %v1350, 4294901760
        %1810 = vmatpush.msra.mxu0 %v1809
        %v1811 = vand.u32 %v1349, 4294901760
        %1812 = vmatpush.msra.mxu0 %v1811
        %v1813 = vand.u32 %v1348, 4294901760
        %1814 = vmatpush.msra.mxu0 %v1813
        %v1815 = vand.u32 %v1347, 4294901760
        %1816 = vmatpush.msra.mxu0 %v1815
        %v1817 = vand.u32 %v1346, 4294901760
        %1818 = vmatpush.msra.mxu0 %v1817
        %v1819 = vand.u32 %v1345, 4294901760
        %1820 = vmatpush.msra.mxu0 %v1819
        %v1821 = vand.u32 %v1344, 4294901760
        %1822 = vmatpush.msra.mxu0 %v1821
        %v1823 = vand.u32 %v1343, 4294901760
        %1824 = vmatpush.msra.mxu0 %v1823
        %v1825 = vand.u32 %v1342, 4294901760
        %1826 = vmatpush.msra.mxu0 %v1825
        %v1827 = vand.u32 %v1341, 4294901760
        %1828 = vmatpush.msra.mxu0 %v1827
        %v1829 = vand.u32 %v1340, 4294901760
        %1830 = vmatpush.msra.mxu0 %v1829
        %v1831 = vand.u32 %v1339, 4294901760
        %1832 = vmatpush.msra.mxu0 %v1831
        %v1833 = vand.u32 %v1338, 4294901760
        %1834 = vmatpush.msra.mxu0 %v1833
        %v1835 = vand.u32 %v1337, 4294901760
        %1836 = vmatpush.msra.mxu0 %v1835
        %v1837 = vand.u32 %v1336, 4294901760
        %1838 = vmatpush.msra.mxu0 %v1837
        %v1839 = vand.u32 %v1320, 4294901760
        %v1840 = vsub.f32 %v1320, %v1839
        %v1841 = vand.u32 %v1840, 4294901760
        %1842 = vmatmul.f32.gmra.mxu0 %v1841
        %v1843 = vpop.f32.mrf.mxu0
        %v1844 = vadd.f32 %v1730, %v1843
        %v1845 = vand.u32 %v1321, 4294901760
        %v1846 = vsub.f32 %v1321, %v1845
        %v1847 = vand.u32 %v1846, 4294901760
        %1848 = vmatmul.f32.gmra.mxu0 %v1847
        %v1849 = vpop.f32.mrf.mxu0
        %v1850 = vadd.f32 %v1735, %v1849
        %v1851 = vand.u32 %v1322, 4294901760
        %v1852 = vsub.f32 %v1322, %v1851
        %v1853 = vand.u32 %v1852, 4294901760
        %1854 = vmatmul.f32.gmra.mxu0 %v1853
        %v1855 = vpop.f32.mrf.mxu0
        %v1856 = vadd.f32 %v1740, %v1855
        %v1857 = vand.u32 %v1323, 4294901760
        %v1858 = vsub.f32 %v1323, %v1857
        %v1859 = vand.u32 %v1858, 4294901760
        %1860 = vmatmul.f32.gmra.mxu0 %v1859
        %v1861 = vpop.f32.mrf.mxu0
        %v1862 = vadd.f32 %v1745, %v1861
        %v1863 = vand.u32 %v1324, 4294901760
        %v1864 = vsub.f32 %v1324, %v1863
        %v1865 = vand.u32 %v1864, 4294901760
        %1866 = vmatmul.f32.gmra.mxu0 %v1865
        %v1867 = vpop.f32.mrf.mxu0
        %v1868 = vadd.f32 %v1750, %v1867
        %v1869 = vand.u32 %v1325, 4294901760
        %v1870 = vsub.f32 %v1325, %v1869
        %v1871 = vand.u32 %v1870, 4294901760
        %1872 = vmatmul.f32.gmra.mxu0 %v1871
        %v1873 = vpop.f32.mrf.mxu0
        %v1874 = vadd.f32 %v1755, %v1873
        %v1875 = vand.u32 %v1326, 4294901760
        %v1876 = vsub.f32 %v1326, %v1875
        %v1877 = vand.u32 %v1876, 4294901760
        %1878 = vmatmul.f32.gmra.mxu0 %v1877
        %v1879 = vpop.f32.mrf.mxu0
        %v1880 = vadd.f32 %v1760, %v1879
        %v1881 = vand.u32 %v1327, 4294901760
        %v1882 = vsub.f32 %v1327, %v1881
        %v1883 = vand.u32 %v1882, 4294901760
        %1884 = vmatmul.f32.gmra.mxu0 %v1883
        %v1885 = vpop.f32.mrf.mxu0
        %v1886 = vadd.f32 %v1765, %v1885
        %v1887 = vand.u32 %v1328, 4294901760
        %v1888 = vsub.f32 %v1328, %v1887
        %v1889 = vand.u32 %v1888, 4294901760
        %1890 = vmatmul.f32.gmra.mxu0 %v1889
        %v1891 = vpop.f32.mrf.mxu0
        %v1892 = vadd.f32 %v1770, %v1891
        %v1893 = vand.u32 %v1329, 4294901760
        %v1894 = vsub.f32 %v1329, %v1893
        %v1895 = vand.u32 %v1894, 4294901760
        %1896 = vmatmul.f32.gmra.mxu0 %v1895
        %v1897 = vpop.f32.mrf.mxu0
        %v1898 = vadd.f32 %v1775, %v1897
        %v1899 = vand.u32 %v1330, 4294901760
        %v1900 = vsub.f32 %v1330, %v1899
        %v1901 = vand.u32 %v1900, 4294901760
        %1902 = vmatmul.f32.gmra.mxu0 %v1901
        %v1903 = vpop.f32.mrf.mxu0
        %v1904 = vadd.f32 %v1780, %v1903
        %v1905 = vand.u32 %v1331, 4294901760
        %v1906 = vsub.f32 %v1331, %v1905
        %v1907 = vand.u32 %v1906, 4294901760
        %1908 = vmatmul.f32.gmra.mxu0 %v1907
        %v1909 = vpop.f32.mrf.mxu0
        %v1910 = vadd.f32 %v1785, %v1909
        %v1911 = vand.u32 %v1332, 4294901760
        %v1912 = vsub.f32 %v1332, %v1911
        %v1913 = vand.u32 %v1912, 4294901760
        %1914 = vmatmul.f32.gmra.mxu0 %v1913
        %v1915 = vpop.f32.mrf.mxu0
        %v1916 = vadd.f32 %v1790, %v1915
        %v1917 = vand.u32 %v1333, 4294901760
        %v1918 = vsub.f32 %v1333, %v1917
        %v1919 = vand.u32 %v1918, 4294901760
        %1920 = vmatmul.f32.gmra.mxu0 %v1919
        %v1921 = vpop.f32.mrf.mxu0
        %v1922 = vadd.f32 %v1795, %v1921
        %v1923 = vand.u32 %v1334, 4294901760
        %v1924 = vsub.f32 %v1334, %v1923
        %v1925 = vand.u32 %v1924, 4294901760
        %1926 = vmatmul.f32.gmra.mxu0 %v1925
        %v1927 = vpop.f32.mrf.mxu0
        %v1928 = vadd.f32 %v1800, %v1927
        %v1929 = vand.u32 %v1335, 4294901760
        %v1930 = vsub.f32 %v1335, %v1929
        %v1931 = vand.u32 %v1930, 4294901760
        %1932 = vmatmul.f32.gmra.mxu0 %v1931
        %v1933 = vpop.f32.mrf.mxu0
        %v1934 = vadd.f32 %v1805, %v1933
        %1935 = vdwg.mxu0
        %v1936 = vand.u32 %v1351, 4294901760
        %v1937 = vsub.f32 %v1351, %v1936
        %v1938 = vand.u32 %v1937, 4294901760
        %1939 = vmatpush.msra.mxu0 %v1938
        %v1940 = vand.u32 %v1350, 4294901760
        %v1941 = vsub.f32 %v1350, %v1940
        %v1942 = vand.u32 %v1941, 4294901760
        %1943 = vmatpush.msra.mxu0 %v1942
        %v1944 = vand.u32 %v1349, 4294901760
        %v1945 = vsub.f32 %v1349, %v1944
        %v1946 = vand.u32 %v1945, 4294901760
        %1947 = vmatpush.msra.mxu0 %v1946
        %v1948 = vand.u32 %v1348, 4294901760
        %v1949 = vsub.f32 %v1348, %v1948
        %v1950 = vand.u32 %v1949, 4294901760
        %1951 = vmatpush.msra.mxu0 %v1950
        %v1952 = vand.u32 %v1347, 4294901760
        %v1953 = vsub.f32 %v1347, %v1952
        %v1954 = vand.u32 %v1953, 4294901760
        %1955 = vmatpush.msra.mxu0 %v1954
        %v1956 = vand.u32 %v1346, 4294901760
        %v1957 = vsub.f32 %v1346, %v1956
        %v1958 = vand.u32 %v1957, 4294901760
        %1959 = vmatpush.msra.mxu0 %v1958
        %v1960 = vand.u32 %v1345, 4294901760
        %v1961 = vsub.f32 %v1345, %v1960
        %v1962 = vand.u32 %v1961, 4294901760
        %1963 = vmatpush.msra.mxu0 %v1962
        %v1964 = vand.u32 %v1344, 4294901760
        %v1965 = vsub.f32 %v1344, %v1964
        %v1966 = vand.u32 %v1965, 4294901760
        %1967 = vmatpush.msra.mxu0 %v1966
        %v1968 = vand.u32 %v1343, 4294901760
        %v1969 = vsub.f32 %v1343, %v1968
        %v1970 = vand.u32 %v1969, 4294901760
        %1971 = vmatpush.msra.mxu0 %v1970
        %v1972 = vand.u32 %v1342, 4294901760
        %v1973 = vsub.f32 %v1342, %v1972
        %v1974 = vand.u32 %v1973, 4294901760
        %1975 = vmatpush.msra.mxu0 %v1974
        %v1976 = vand.u32 %v1341, 4294901760
        %v1977 = vsub.f32 %v1341, %v1976
        %v1978 = vand.u32 %v1977, 4294901760
        %1979 = vmatpush.msra.mxu0 %v1978
        %v1980 = vand.u32 %v1340, 4294901760
        %v1981 = vsub.f32 %v1340, %v1980
        %v1982 = vand.u32 %v1981, 4294901760
        %1983 = vmatpush.msra.mxu0 %v1982
        %v1984 = vand.u32 %v1339, 4294901760
        %v1985 = vsub.f32 %v1339, %v1984
        %v1986 = vand.u32 %v1985, 4294901760
        %1987 = vmatpush.msra.mxu0 %v1986
        %v1988 = vand.u32 %v1338, 4294901760
        %v1989 = vsub.f32 %v1338, %v1988
        %v1990 = vand.u32 %v1989, 4294901760
        %1991 = vmatpush.msra.mxu0 %v1990
        %v1992 = vand.u32 %v1337, 4294901760
        %v1993 = vsub.f32 %v1337, %v1992
        %v1994 = vand.u32 %v1993, 4294901760
        %1995 = vmatpush.msra.mxu0 %v1994
        %v1996 = vand.u32 %v1336, 4294901760
        %v1997 = vsub.f32 %v1336, %v1996
        %v1998 = vand.u32 %v1997, 4294901760
        %1999 = vmatpush.msra.mxu0 %v1998
        %v2000 = vand.u32 %v1320, 4294901760
        %2001 = vmatmul.f32.gmra.mxu0 %v2000
        %v2002 = vpop.f32.mrf.mxu0
        %v2003 = vadd.f32 %v1844, %v2002
        %v2004 = vand.u32 %v1321, 4294901760
        %2005 = vmatmul.f32.gmra.mxu0 %v2004
        %v2006 = vpop.f32.mrf.mxu0
        %v2007 = vadd.f32 %v1850, %v2006
        %v2008 = vand.u32 %v1322, 4294901760
        %2009 = vmatmul.f32.gmra.mxu0 %v2008
        %v2010 = vpop.f32.mrf.mxu0
        %v2011 = vadd.f32 %v1856, %v2010
        %v2012 = vand.u32 %v1323, 4294901760
        %2013 = vmatmul.f32.gmra.mxu0 %v2012
        %v2014 = vpop.f32.mrf.mxu0
        %v2015 = vadd.f32 %v1862, %v2014
        %v2016 = vand.u32 %v1324, 4294901760
        %2017 = vmatmul.f32.gmra.mxu0 %v2016
        %v2018 = vpop.f32.mrf.mxu0
        %v2019 = vadd.f32 %v1868, %v2018
        %v2020 = vand.u32 %v1325, 4294901760
        %2021 = vmatmul.f32.gmra.mxu0 %v2020
        %v2022 = vpop.f32.mrf.mxu0
        %v2023 = vadd.f32 %v1874, %v2022
        %v2024 = vand.u32 %v1326, 4294901760
        %2025 = vmatmul.f32.gmra.mxu0 %v2024
        %v2026 = vpop.f32.mrf.mxu0
        %v2027 = vadd.f32 %v1880, %v2026
        %v2028 = vand.u32 %v1327, 4294901760
        %2029 = vmatmul.f32.gmra.mxu0 %v2028
        %v2030 = vpop.f32.mrf.mxu0
        %v2031 = vadd.f32 %v1886, %v2030
        %v2032 = vand.u32 %v1328, 4294901760
        %2033 = vmatmul.f32.gmra.mxu0 %v2032
        %v2034 = vpop.f32.mrf.mxu0
        %v2035 = vadd.f32 %v1892, %v2034
        %v2036 = vand.u32 %v1329, 4294901760
        %2037 = vmatmul.f32.gmra.mxu0 %v2036
        %v2038 = vpop.f32.mrf.mxu0
        %v2039 = vadd.f32 %v1898, %v2038
        %v2040 = vand.u32 %v1330, 4294901760
        %2041 = vmatmul.f32.gmra.mxu0 %v2040
        %v2042 = vpop.f32.mrf.mxu0
        %v2043 = vadd.f32 %v1904, %v2042
        %v2044 = vand.u32 %v1331, 4294901760
        %2045 = vmatmul.f32.gmra.mxu0 %v2044
        %v2046 = vpop.f32.mrf.mxu0
        %v2047 = vadd.f32 %v1910, %v2046
        %v2048 = vand.u32 %v1332, 4294901760
        %2049 = vmatmul.f32.gmra.mxu0 %v2048
        %v2050 = vpop.f32.mrf.mxu0
        %v2051 = vadd.f32 %v1916, %v2050
        %v2052 = vand.u32 %v1333, 4294901760
        %2053 = vmatmul.f32.gmra.mxu0 %v2052
        %v2054 = vpop.f32.mrf.mxu0
        %v2055 = vadd.f32 %v1922, %v2054
        %v2056 = vand.u32 %v1334, 4294901760
        %2057 = vmatmul.f32.gmra.mxu0 %v2056
        %v2058 = vpop.f32.mrf.mxu0
        %v2059 = vadd.f32 %v1928, %v2058
        %v2060 = vand.u32 %v1335, 4294901760
        %2061 = vmatmul.f32.gmra.mxu0 %v2060
        %v2062 = vpop.f32.mrf.mxu0
        %v2063 = vadd.f32 %v1934, %v2062
        %2064 = vdwg.mxu0
        %v2065 = vand.u32 %v1351, 4294901760
        %2066 = vmatpush.msra.mxu0 %v2065
        %v2067 = vand.u32 %v1350, 4294901760
        %2068 = vmatpush.msra.mxu0 %v2067
        %v2069 = vand.u32 %v1349, 4294901760
        %2070 = vmatpush.msra.mxu0 %v2069
        %v2071 = vand.u32 %v1348, 4294901760
        %2072 = vmatpush.msra.mxu0 %v2071
        %v2073 = vand.u32 %v1347, 4294901760
        %2074 = vmatpush.msra.mxu0 %v2073
        %v2075 = vand.u32 %v1346, 4294901760
        %2076 = vmatpush.msra.mxu0 %v2075
        %v2077 = vand.u32 %v1345, 4294901760
        %2078 = vmatpush.msra.mxu0 %v2077
        %v2079 = vand.u32 %v1344, 4294901760
        %2080 = vmatpush.msra.mxu0 %v2079
        %v2081 = vand.u32 %v1343, 4294901760
        %2082 = vmatpush.msra.mxu0 %v2081
        %v2083 = vand.u32 %v1342, 4294901760
        %2084 = vmatpush.msra.mxu0 %v2083
        %v2085 = vand.u32 %v1341, 4294901760
        %2086 = vmatpush.msra.mxu0 %v2085
        %v2087 = vand.u32 %v1340, 4294901760
        %2088 = vmatpush.msra.mxu0 %v2087
        %v2089 = vand.u32 %v1339, 4294901760
        %2090 = vmatpush.msra.mxu0 %v2089
        %v2091 = vand.u32 %v1338, 4294901760
        %2092 = vmatpush.msra.mxu0 %v2091
        %v2093 = vand.u32 %v1337, 4294901760
        %2094 = vmatpush.msra.mxu0 %v2093
        %v2095 = vand.u32 %v1336, 4294901760
        %2096 = vmatpush.msra.mxu0 %v2095
        %v2097 = vand.u32 %v1320, 4294901760
        %2098 = vmatmul.f32.gmra.mxu0 %v2097
        %v2099 = vpop.f32.mrf.mxu0
        %v2100 = vadd.f32 %v2003, %v2099
        %v2101 = vand.u32 %v1321, 4294901760
        %2102 = vmatmul.f32.gmra.mxu0 %v2101
        %v2103 = vpop.f32.mrf.mxu0
        %v2104 = vadd.f32 %v2007, %v2103
        %v2105 = vand.u32 %v1322, 4294901760
        %2106 = vmatmul.f32.gmra.mxu0 %v2105
        %v2107 = vpop.f32.mrf.mxu0
        %v2108 = vadd.f32 %v2011, %v2107
        %v2109 = vand.u32 %v1323, 4294901760
        %2110 = vmatmul.f32.gmra.mxu0 %v2109
        %v2111 = vpop.f32.mrf.mxu0
        %v2112 = vadd.f32 %v2015, %v2111
        %v2113 = vand.u32 %v1324, 4294901760
        %2114 = vmatmul.f32.gmra.mxu0 %v2113
        %v2115 = vpop.f32.mrf.mxu0
        %v2116 = vadd.f32 %v2019, %v2115
        %v2117 = vand.u32 %v1325, 4294901760
        %2118 = vmatmul.f32.gmra.mxu0 %v2117
        %v2119 = vpop.f32.mrf.mxu0
        %v2120 = vadd.f32 %v2023, %v2119
        %v2121 = vand.u32 %v1326, 4294901760
        %2122 = vmatmul.f32.gmra.mxu0 %v2121
        %v2123 = vpop.f32.mrf.mxu0
        %v2124 = vadd.f32 %v2027, %v2123
        %v2125 = vand.u32 %v1327, 4294901760
        %2126 = vmatmul.f32.gmra.mxu0 %v2125
        %v2127 = vpop.f32.mrf.mxu0
        %v2128 = vadd.f32 %v2031, %v2127
        %v2129 = vand.u32 %v1328, 4294901760
        %2130 = vmatmul.f32.gmra.mxu0 %v2129
        %v2131 = vpop.f32.mrf.mxu0
        %v2132 = vadd.f32 %v2035, %v2131
        %v2133 = vand.u32 %v1329, 4294901760
        %2134 = vmatmul.f32.gmra.mxu0 %v2133
        %v2135 = vpop.f32.mrf.mxu0
        %v2136 = vadd.f32 %v2039, %v2135
        %v2137 = vand.u32 %v1330, 4294901760
        %2138 = vmatmul.f32.gmra.mxu0 %v2137
        %v2139 = vpop.f32.mrf.mxu0
        %v2140 = vadd.f32 %v2043, %v2139
        %v2141 = vand.u32 %v1331, 4294901760
        %2142 = vmatmul.f32.gmra.mxu0 %v2141
        %v2143 = vpop.f32.mrf.mxu0
        %v2144 = vadd.f32 %v2047, %v2143
        %v2145 = vand.u32 %v1332, 4294901760
        %2146 = vmatmul.f32.gmra.mxu0 %v2145
        %v2147 = vpop.f32.mrf.mxu0
        %v2148 = vadd.f32 %v2051, %v2147
        %v2149 = vand.u32 %v1333, 4294901760
        %2150 = vmatmul.f32.gmra.mxu0 %v2149
        %v2151 = vpop.f32.mrf.mxu0
        %v2152 = vadd.f32 %v2055, %v2151
        %v2153 = vand.u32 %v1334, 4294901760
        %2154 = vmatmul.f32.gmra.mxu0 %v2153
        %v2155 = vpop.f32.mrf.mxu0
        %v2156 = vadd.f32 %v2059, %v2155
        %v2157 = vand.u32 %v1335, 4294901760
        %2158 = vmatmul.f32.gmra.mxu0 %v2157
        %v2159 = vpop.f32.mrf.mxu0
        %v2160 = vadd.f32 %v2063, %v2159
        %2161 = vdwg.mxu0
        %v2162 = vld [vmem:[%s368] sm:$0xff]
        %v2163 = vld [vmem:[%s368 + $0x8] sm:$0xff]
        %v2164 = vld [vmem:[%s368 + $0x10] sm:$0xff]
        %v2165 = vld [vmem:[%s368 + $0x18] sm:$0xff]
        %v2166 = vld [vmem:[%s368 + $0x20] sm:$0xff]
        %v2167 = vld [vmem:[%s368 + $0x28] sm:$0xff]
        %v2168 = vld [vmem:[%s368 + $0x30] sm:$0xff]
        %v2169 = vld [vmem:[%s368 + $0x38] sm:$0xff]
        %v2170 = vld [vmem:[%s368 + $0x40] sm:$0xff]
        %v2171 = vld [vmem:[%s368 + $0x48] sm:$0xff]
        %v2172 = vld [vmem:[%s368 + $0x50] sm:$0xff]
        %v2173 = vld [vmem:[%s368 + $0x58] sm:$0xff]
        %v2174 = vld [vmem:[%s368 + $0x60] sm:$0xff]
        %v2175 = vld [vmem:[%s368 + $0x68] sm:$0xff]
        %v2176 = vld [vmem:[%s368 + $0x70] sm:$0xff]
        %v2177 = vld [vmem:[%s368 + $0x78] sm:$0xff]
        %v2178 = vmul.f32 %v2162, %v2100
        %v2179 = vmul.f32 %v2163, %v2104
        %v2180 = vmul.f32 %v2164, %v2108
        %v2181 = vmul.f32 %v2165, %v2112
        %v2182 = vmul.f32 %v2166, %v2116
        %v2183 = vmul.f32 %v2167, %v2120
        %v2184 = vmul.f32 %v2168, %v2124
        %v2185 = vmul.f32 %v2169, %v2128
        %v2186 = vmul.f32 %v2170, %v2132
        %v2187 = vmul.f32 %v2171, %v2136
        %v2188 = vmul.f32 %v2172, %v2140
        %v2189 = vmul.f32 %v2173, %v2144
        %v2190 = vmul.f32 %v2174, %v2148
        %v2191 = vmul.f32 %v2175, %v2152
        %v2192 = vmul.f32 %v2176, %v2156
        %v2193 = vmul.f32 %v2177, %v2160
        %v2194 = vld [vmem:[%s376] sm:$0x1]
        %v2195 = vlaneseq
        %v2196 = vshrl.u32 %v2195, 7
        %v2197 = vadd.s32 %v2196, 8
        %v2198 = vperm.slane %v2194, 0
        %vm2199 = vcmp.eq.s32.totalorder %v2198, %v2196
        %vm2200 = vcmp.eq.s32.totalorder %v2198, %v2197
        %v2201 = vsel %vm2199, 1, 0
        %v2202 = vsel %vm2200, 1, 0
        %v2203 = vcvt.s32.f32 %v2201
        %v2204 = vcvt.s32.f32 %v2202
        %v2205 = vld [vmem:[#allocation5] sm:$0xff]
        %v2206 = vld [vmem:[#allocation5 + $0x8] sm:$0xff]
        %v2207 = vand.u32 %v2193, 4294901760
        %2208 = vmatpush.msra.mxu0 %v2207
        %v2209 = vand.u32 %v2192, 4294901760
        %2210 = vmatpush.msra.mxu0 %v2209
        %v2211 = vand.u32 %v2191, 4294901760
        %2212 = vmatpush.msra.mxu0 %v2211
        %v2213 = vand.u32 %v2190, 4294901760
        %2214 = vmatpush.msra.mxu0 %v2213
        %v2215 = vand.u32 %v2189, 4294901760
        %2216 = vmatpush.msra.mxu0 %v2215
        %v2217 = vand.u32 %v2188, 4294901760
        %2218 = vmatpush.msra.mxu0 %v2217
        %v2219 = vand.u32 %v2187, 4294901760
        %2220 = vmatpush.msra.mxu0 %v2219
        %v2221 = vand.u32 %v2186, 4294901760
        %2222 = vmatpush.msra.mxu0 %v2221
        %v2223 = vand.u32 %v2185, 4294901760
        %2224 = vmatpush.msra.mxu0 %v2223
        %v2225 = vand.u32 %v2184, 4294901760
        %2226 = vmatpush.msra.mxu0 %v2225
        %v2227 = vand.u32 %v2183, 4294901760
        %2228 = vmatpush.msra.mxu0 %v2227
        %v2229 = vand.u32 %v2182, 4294901760
        %2230 = vmatpush.msra.mxu0 %v2229
        %v2231 = vand.u32 %v2181, 4294901760
        %2232 = vmatpush.msra.mxu0 %v2231
        %v2233 = vand.u32 %v2180, 4294901760
        %2234 = vmatpush.msra.mxu0 %v2233
        %v2235 = vand.u32 %v2179, 4294901760
        %2236 = vmatpush.msra.mxu0 %v2235
        %v2237 = vand.u32 %v2178, 4294901760
        %2238 = vmatpush.msra.mxu0 %v2237
        %v2239 = vand.u32 %v2203, 4294901760
        %v2240 = vsub.f32 %v2203, %v2239
        %v2241 = vand.u32 %v2240, 4294901760
        %v2242 = vsub.f32 %v2240, %v2241
        %v2243 = vand.u32 %v2242, 4294901760
        %2244 = vmatmul.f32.gmra.mxu0 %v2243
        %v2245 = vpop.f32.mrf.mxu0
        %v2246 = vadd.f32 0.0, %v2245
        %v2247 = vand.u32 %v2204, 4294901760
        %v2248 = vsub.f32 %v2204, %v2247
        %v2249 = vand.u32 %v2248, 4294901760
        %v2250 = vsub.f32 %v2248, %v2249
        %v2251 = vand.u32 %v2250, 4294901760
        %2252 = vmatmul.f32.gmra.mxu0 %v2251
        %v2253 = vpop.f32.mrf.mxu0
        %v2254 = vadd.f32 0.0, %v2253
        %2255 = vdwg.mxu0
        %v2256 = vand.u32 %v2193, 4294901760
        %v2257 = vsub.f32 %v2193, %v2256
        %v2258 = vand.u32 %v2257, 4294901760
        %v2259 = vsub.f32 %v2257, %v2258
        %v2260 = vand.u32 %v2259, 4294901760
        %2261 = vmatpush.msra.mxu0 %v2260
        %v2262 = vand.u32 %v2192, 4294901760
        %v2263 = vsub.f32 %v2192, %v2262
        %v2264 = vand.u32 %v2263, 4294901760
        %v2265 = vsub.f32 %v2263, %v2264
        %v2266 = vand.u32 %v2265, 4294901760
        %2267 = vmatpush.msra.mxu0 %v2266
        %v2268 = vand.u32 %v2191, 4294901760
        %v2269 = vsub.f32 %v2191, %v2268
        %v2270 = vand.u32 %v2269, 4294901760
        %v2271 = vsub.f32 %v2269, %v2270
        %v2272 = vand.u32 %v2271, 4294901760
        %2273 = vmatpush.msra.mxu0 %v2272
        %v2274 = vand.u32 %v2190, 4294901760
        %v2275 = vsub.f32 %v2190, %v2274
        %v2276 = vand.u32 %v2275, 4294901760
        %v2277 = vsub.f32 %v2275, %v2276
        %v2278 = vand.u32 %v2277, 4294901760
        %2279 = vmatpush.msra.mxu0 %v2278
        %v2280 = vand.u32 %v2189, 4294901760
        %v2281 = vsub.f32 %v2189, %v2280
        %v2282 = vand.u32 %v2281, 4294901760
        %v2283 = vsub.f32 %v2281, %v2282
        %v2284 = vand.u32 %v2283, 4294901760
        %2285 = vmatpush.msra.mxu0 %v2284
        %v2286 = vand.u32 %v2188, 4294901760
        %v2287 = vsub.f32 %v2188, %v2286
        %v2288 = vand.u32 %v2287, 4294901760
        %v2289 = vsub.f32 %v2287, %v2288
        %v2290 = vand.u32 %v2289, 4294901760
        %2291 = vmatpush.msra.mxu0 %v2290
        %v2292 = vand.u32 %v2187, 4294901760
        %v2293 = vsub.f32 %v2187, %v2292
        %v2294 = vand.u32 %v2293, 4294901760
        %v2295 = vsub.f32 %v2293, %v2294
        %v2296 = vand.u32 %v2295, 4294901760
        %2297 = vmatpush.msra.mxu0 %v2296
        %v2298 = vand.u32 %v2186, 4294901760
        %v2299 = vsub.f32 %v2186, %v2298
        %v2300 = vand.u32 %v2299, 4294901760
        %v2301 = vsub.f32 %v2299, %v2300
        %v2302 = vand.u32 %v2301, 4294901760
        %2303 = vmatpush.msra.mxu0 %v2302
        %v2304 = vand.u32 %v2185, 4294901760
        %v2305 = vsub.f32 %v2185, %v2304
        %v2306 = vand.u32 %v2305, 4294901760
        %v2307 = vsub.f32 %v2305, %v2306
        %v2308 = vand.u32 %v2307, 4294901760
        %2309 = vmatpush.msra.mxu0 %v2308
        %v2310 = vand.u32 %v2184, 4294901760
        %v2311 = vsub.f32 %v2184, %v2310
        %v2312 = vand.u32 %v2311, 4294901760
        %v2313 = vsub.f32 %v2311, %v2312
        %v2314 = vand.u32 %v2313, 4294901760
        %2315 = vmatpush.msra.mxu0 %v2314
        %v2316 = vand.u32 %v2183, 4294901760
        %v2317 = vsub.f32 %v2183, %v2316
        %v2318 = vand.u32 %v2317, 4294901760
        %v2319 = vsub.f32 %v2317, %v2318
        %v2320 = vand.u32 %v2319, 4294901760
        %2321 = vmatpush.msra.mxu0 %v2320
        %v2322 = vand.u32 %v2182, 4294901760
        %v2323 = vsub.f32 %v2182, %v2322
        %v2324 = vand.u32 %v2323, 4294901760
        %v2325 = vsub.f32 %v2323, %v2324
        %v2326 = vand.u32 %v2325, 4294901760
        %2327 = vmatpush.msra.mxu0 %v2326
        %v2328 = vand.u32 %v2181, 4294901760
        %v2329 = vsub.f32 %v2181, %v2328
        %v2330 = vand.u32 %v2329, 4294901760
        %v2331 = vsub.f32 %v2329, %v2330
        %v2332 = vand.u32 %v2331, 4294901760
        %2333 = vmatpush.msra.mxu0 %v2332
        %v2334 = vand.u32 %v2180, 4294901760
        %v2335 = vsub.f32 %v2180, %v2334
        %v2336 = vand.u32 %v2335, 4294901760
        %v2337 = vsub.f32 %v2335, %v2336
        %v2338 = vand.u32 %v2337, 4294901760
        %2339 = vmatpush.msra.mxu0 %v2338
        %v2340 = vand.u32 %v2179, 4294901760
        %v2341 = vsub.f32 %v2179, %v2340
        %v2342 = vand.u32 %v2341, 4294901760
        %v2343 = vsub.f32 %v2341, %v2342
        %v2344 = vand.u32 %v2343, 4294901760
        %2345 = vmatpush.msra.mxu0 %v2344
        %v2346 = vand.u32 %v2178, 4294901760
        %v2347 = vsub.f32 %v2178, %v2346
        %v2348 = vand.u32 %v2347, 4294901760
        %v2349 = vsub.f32 %v2347, %v2348
        %v2350 = vand.u32 %v2349, 4294901760
        %2351 = vmatpush.msra.mxu0 %v2350
        %v2352 = vand.u32 %v2203, 4294901760
        %2353 = vmatmul.f32.gmra.mxu0 %v2352
        %v2354 = vpop.f32.mrf.mxu0
        %v2355 = vadd.f32 %v2246, %v2354
        %v2356 = vand.u32 %v2204, 4294901760
        %2357 = vmatmul.f32.gmra.mxu0 %v2356
        %v2358 = vpop.f32.mrf.mxu0
        %v2359 = vadd.f32 %v2254, %v2358
        %2360 = vdwg.mxu0
        %v2361 = vand.u32 %v2193, 4294901760
        %v2362 = vsub.f32 %v2193, %v2361
        %2363 = vmatpush.msra.mxu0 %v2362
        %v2364 = vand.u32 %v2192, 4294901760
        %v2365 = vsub.f32 %v2192, %v2364
        %2366 = vmatpush.msra.mxu0 %v2365
        %v2367 = vand.u32 %v2191, 4294901760
        %v2368 = vsub.f32 %v2191, %v2367
        %2369 = vmatpush.msra.mxu0 %v2368
        %v2370 = vand.u32 %v2190, 4294901760
        %v2371 = vsub.f32 %v2190, %v2370
        %2372 = vmatpush.msra.mxu0 %v2371
        %v2373 = vand.u32 %v2189, 4294901760
        %v2374 = vsub.f32 %v2189, %v2373
        %2375 = vmatpush.msra.mxu0 %v2374
        %v2376 = vand.u32 %v2188, 4294901760
        %v2377 = vsub.f32 %v2188, %v2376
        %2378 = vmatpush.msra.mxu0 %v2377
        %v2379 = vand.u32 %v2187, 4294901760
        %v2380 = vsub.f32 %v2187, %v2379
        %2381 = vmatpush.msra.mxu0 %v2380
        %v2382 = vand.u32 %v2186, 4294901760
        %v2383 = vsub.f32 %v2186, %v2382
        %2384 = vmatpush.msra.mxu0 %v2383
        %v2385 = vand.u32 %v2185, 4294901760
        %v2386 = vsub.f32 %v2185, %v2385
        %2387 = vmatpush.msra.mxu0 %v2386
        %v2388 = vand.u32 %v2184, 4294901760
        %v2389 = vsub.f32 %v2184, %v2388
        %2390 = vmatpush.msra.mxu0 %v2389
        %v2391 = vand.u32 %v2183, 4294901760
        %v2392 = vsub.f32 %v2183, %v2391
        %2393 = vmatpush.msra.mxu0 %v2392
        %v2394 = vand.u32 %v2182, 4294901760
        %v2395 = vsub.f32 %v2182, %v2394
        %2396 = vmatpush.msra.mxu0 %v2395
        %v2397 = vand.u32 %v2181, 4294901760
        %v2398 = vsub.f32 %v2181, %v2397
        %2399 = vmatpush.msra.mxu0 %v2398
        %v2400 = vand.u32 %v2180, 4294901760
        %v2401 = vsub.f32 %v2180, %v2400
        %2402 = vmatpush.msra.mxu0 %v2401
        %v2403 = vand.u32 %v2179, 4294901760
        %v2404 = vsub.f32 %v2179, %v2403
        %2405 = vmatpush.msra.mxu0 %v2404
        %v2406 = vand.u32 %v2178, 4294901760
        %v2407 = vsub.f32 %v2178, %v2406
        %2408 = vmatpush.msra.mxu0 %v2407
        %v2409 = vand.u32 %v2203, 4294901760
        %v2410 = vsub.f32 %v2203, %v2409
        %2411 = vmatmul.f32.gmra.mxu0 %v2410
        %v2412 = vpop.f32.mrf.mxu0
        %v2413 = vadd.f32 %v2355, %v2412
        %v2414 = vand.u32 %v2204, 4294901760
        %v2415 = vsub.f32 %v2204, %v2414
        %2416 = vmatmul.f32.gmra.mxu0 %v2415
        %v2417 = vpop.f32.mrf.mxu0
        %v2418 = vadd.f32 %v2359, %v2417
        %2419 = vdwg.mxu0
        %v2420 = vand.u32 %v2193, 4294901760
        %2421 = vmatpush.msra.mxu0 %v2420
        %v2422 = vand.u32 %v2192, 4294901760
        %2423 = vmatpush.msra.mxu0 %v2422
        %v2424 = vand.u32 %v2191, 4294901760
        %2425 = vmatpush.msra.mxu0 %v2424
        %v2426 = vand.u32 %v2190, 4294901760
        %2427 = vmatpush.msra.mxu0 %v2426
        %v2428 = vand.u32 %v2189, 4294901760
        %2429 = vmatpush.msra.mxu0 %v2428
        %v2430 = vand.u32 %v2188, 4294901760
        %2431 = vmatpush.msra.mxu0 %v2430
        %v2432 = vand.u32 %v2187, 4294901760
        %2433 = vmatpush.msra.mxu0 %v2432
        %v2434 = vand.u32 %v2186, 4294901760
        %2435 = vmatpush.msra.mxu0 %v2434
        %v2436 = vand.u32 %v2185, 4294901760
        %2437 = vmatpush.msra.mxu0 %v2436
        %v2438 = vand.u32 %v2184, 4294901760
        %2439 = vmatpush.msra.mxu0 %v2438
        %v2440 = vand.u32 %v2183, 4294901760
        %2441 = vmatpush.msra.mxu0 %v2440
        %v2442 = vand.u32 %v2182, 4294901760
        %2443 = vmatpush.msra.mxu0 %v2442
        %v2444 = vand.u32 %v2181, 4294901760
        %2445 = vmatpush.msra.mxu0 %v2444
        %v2446 = vand.u32 %v2180, 4294901760
        %2447 = vmatpush.msra.mxu0 %v2446
        %v2448 = vand.u32 %v2179, 4294901760
        %2449 = vmatpush.msra.mxu0 %v2448
        %v2450 = vand.u32 %v2178, 4294901760
        %2451 = vmatpush.msra.mxu0 %v2450
        %v2452 = vand.u32 %v2203, 4294901760
        %v2453 = vsub.f32 %v2203, %v2452
        %v2454 = vand.u32 %v2453, 4294901760
        %2455 = vmatmul.f32.gmra.mxu0 %v2454
        %v2456 = vpop.f32.mrf.mxu0
        %v2457 = vadd.f32 %v2413, %v2456
        %v2458 = vand.u32 %v2204, 4294901760
        %v2459 = vsub.f32 %v2204, %v2458
        %v2460 = vand.u32 %v2459, 4294901760
        %2461 = vmatmul.f32.gmra.mxu0 %v2460
        %v2462 = vpop.f32.mrf.mxu0
        %v2463 = vadd.f32 %v2418, %v2462
        %2464 = vdwg.mxu0
        %v2465 = vand.u32 %v2193, 4294901760
        %v2466 = vsub.f32 %v2193, %v2465
        %v2467 = vand.u32 %v2466, 4294901760
        %2468 = vmatpush.msra.mxu0 %v2467
        %v2469 = vand.u32 %v2192, 4294901760
        %v2470 = vsub.f32 %v2192, %v2469
        %v2471 = vand.u32 %v2470, 4294901760
        %2472 = vmatpush.msra.mxu0 %v2471
        %v2473 = vand.u32 %v2191, 4294901760
        %v2474 = vsub.f32 %v2191, %v2473
        %v2475 = vand.u32 %v2474, 4294901760
        %2476 = vmatpush.msra.mxu0 %v2475
        %v2477 = vand.u32 %v2190, 4294901760
        %v2478 = vsub.f32 %v2190, %v2477
        %v2479 = vand.u32 %v2478, 4294901760
        %2480 = vmatpush.msra.mxu0 %v2479
        %v2481 = vand.u32 %v2189, 4294901760
        %v2482 = vsub.f32 %v2189, %v2481
        %v2483 = vand.u32 %v2482, 4294901760
        %2484 = vmatpush.msra.mxu0 %v2483
        %v2485 = vand.u32 %v2188, 4294901760
        %v2486 = vsub.f32 %v2188, %v2485
        %v2487 = vand.u32 %v2486, 4294901760
        %2488 = vmatpush.msra.mxu0 %v2487
        %v2489 = vand.u32 %v2187, 4294901760
        %v2490 = vsub.f32 %v2187, %v2489
        %v2491 = vand.u32 %v2490, 4294901760
        %2492 = vmatpush.msra.mxu0 %v2491
        %v2493 = vand.u32 %v2186, 4294901760
        %v2494 = vsub.f32 %v2186, %v2493
        %v2495 = vand.u32 %v2494, 4294901760
        %2496 = vmatpush.msra.mxu0 %v2495
        %v2497 = vand.u32 %v2185, 4294901760
        %v2498 = vsub.f32 %v2185, %v2497
        %v2499 = vand.u32 %v2498, 4294901760
        %2500 = vmatpush.msra.mxu0 %v2499
        %v2501 = vand.u32 %v2184, 4294901760
        %v2502 = vsub.f32 %v2184, %v2501
        %v2503 = vand.u32 %v2502, 4294901760
        %2504 = vmatpush.msra.mxu0 %v2503
        %v2505 = vand.u32 %v2183, 4294901760
        %v2506 = vsub.f32 %v2183, %v2505
        %v2507 = vand.u32 %v2506, 4294901760
        %2508 = vmatpush.msra.mxu0 %v2507
        %v2509 = vand.u32 %v2182, 4294901760
        %v2510 = vsub.f32 %v2182, %v2509
        %v2511 = vand.u32 %v2510, 4294901760
        %2512 = vmatpush.msra.mxu0 %v2511
        %v2513 = vand.u32 %v2181, 4294901760
        %v2514 = vsub.f32 %v2181, %v2513
        %v2515 = vand.u32 %v2514, 4294901760
        %2516 = vmatpush.msra.mxu0 %v2515
        %v2517 = vand.u32 %v2180, 4294901760
        %v2518 = vsub.f32 %v2180, %v2517
        %v2519 = vand.u32 %v2518, 4294901760
        %2520 = vmatpush.msra.mxu0 %v2519
        %v2521 = vand.u32 %v2179, 4294901760
        %v2522 = vsub.f32 %v2179, %v2521
        %v2523 = vand.u32 %v2522, 4294901760
        %2524 = vmatpush.msra.mxu0 %v2523
        %v2525 = vand.u32 %v2178, 4294901760
        %v2526 = vsub.f32 %v2178, %v2525
        %v2527 = vand.u32 %v2526, 4294901760
        %2528 = vmatpush.msra.mxu0 %v2527
        %v2529 = vand.u32 %v2203, 4294901760
        %2530 = vmatmul.f32.gmra.mxu0 %v2529
        %v2531 = vpop.f32.mrf.mxu0
        %v2532 = vadd.f32 %v2457, %v2531
        %v2533 = vand.u32 %v2204, 4294901760
        %2534 = vmatmul.f32.gmra.mxu0 %v2533
        %v2535 = vpop.f32.mrf.mxu0
        %v2536 = vadd.f32 %v2463, %v2535
        %2537 = vdwg.mxu0
        %v2538 = vand.u32 %v2193, 4294901760
        %2539 = vmatpush.msra.mxu0 %v2538
        %v2540 = vand.u32 %v2192, 4294901760
        %2541 = vmatpush.msra.mxu0 %v2540
        %v2542 = vand.u32 %v2191, 4294901760
        %2543 = vmatpush.msra.mxu0 %v2542
        %v2544 = vand.u32 %v2190, 4294901760
        %2545 = vmatpush.msra.mxu0 %v2544
        %v2546 = vand.u32 %v2189, 4294901760
        %2547 = vmatpush.msra.mxu0 %v2546
        %v2548 = vand.u32 %v2188, 4294901760
        %2549 = vmatpush.msra.mxu0 %v2548
        %v2550 = vand.u32 %v2187, 4294901760
        %2551 = vmatpush.msra.mxu0 %v2550
        %v2552 = vand.u32 %v2186, 4294901760
        %2553 = vmatpush.msra.mxu0 %v2552
        %v2554 = vand.u32 %v2185, 4294901760
        %2555 = vmatpush.msra.mxu0 %v2554
        %v2556 = vand.u32 %v2184, 4294901760
        %2557 = vmatpush.msra.mxu0 %v2556
        %v2558 = vand.u32 %v2183, 4294901760
        %2559 = vmatpush.msra.mxu0 %v2558
        %v2560 = vand.u32 %v2182, 4294901760
        %2561 = vmatpush.msra.mxu0 %v2560
        %v2562 = vand.u32 %v2181, 4294901760
        %2563 = vmatpush.msra.mxu0 %v2562
        %v2564 = vand.u32 %v2180, 4294901760
        %2565 = vmatpush.msra.mxu0 %v2564
        %v2566 = vand.u32 %v2179, 4294901760
        %2567 = vmatpush.msra.mxu0 %v2566
        %v2568 = vand.u32 %v2178, 4294901760
        %2569 = vmatpush.msra.mxu0 %v2568
        %v2570 = vand.u32 %v2203, 4294901760
        %2571 = vmatmul.f32.gmra.mxu0 %v2570
        %v2572 = vpop.f32.mrf.mxu0
        %v2573 = vadd.f32 %v2532, %v2572
        %v2574 = vand.u32 %v2204, 4294901760
        %2575 = vmatmul.f32.gmra.mxu0 %v2574
        %v2576 = vpop.f32.mrf.mxu0
        %v2577 = vadd.f32 %v2536, %v2576
        %2578 = vdwg.mxu0
        %v2579 = vadd.f32 %v2205, %v2573
        %v2580 = vadd.f32 %v2206, %v2577
        %2581 = vst [vmem:[#allocation5] sm:$0xff] %v2579
        %2582 = vst [vmem:[#allocation5 + $0x8] sm:$0xff] %v2580
        // Predicated region
        $region57: #{tpu_custom_call.1} parent=47 // pred_check
          %p2583 = pneg %p224
        $region58: #{tpu_custom_call.1} parent=47 // pred_check_branch
          %2585 = sbr.rel (%p2583) target = $region60
        $region59: #{tpu_custom_call.1} parent=47 // pred_region
          %2587 = vsyncadd [#allocation4], 0
          %s2588 = smul.addr %s24, 2
          %s2589 = smul.addr %s2588, 8
          %s2590 = scalar_lea.hbm %s7, %s2589
          %s2591 = sshll.u32 [#allocation5], 4
          %s2592 = int_to_ptr.vmem [resolvable:$true] %s2591
          %s2593 = sshll.u32 %s2590, 4
          %s2594 = int_to_ptr.hbm [resolvable:$true] %s2593
          %2599 = dma.vmem_to_hbm [thread:$0]  %s2592, 256, %s2594, [#allocation4], 128, 128, 8
        $region60: #{tpu_custom_call.1} parent=47 // pred_fallthru
          _
        // Predicated region
        $region61: #{tpu_custom_call.1} parent=47 // pred_check
          %p2600 = pneg %p224
        $region62: #{tpu_custom_call.1} parent=47 // pred_check_branch
          %2602 = sbr.rel (%p2600) target = $region64
        $region63: #{tpu_custom_call.1} parent=47 // pred_region
          %2604 = dma.done [#allocation4], 256
        $region64: #{tpu_custom_call.1} parent=47 // pred_fallthru
          _
      $region48: #{tpu_custom_call.1} parent=5 // pred_fallthru
        _
      %p2605 = scmp.le.s32.totalorder 2, %s15
      // Predicated region
      $region65: #{tpu_custom_call.1} parent=5 // pred_check
        %p2606 = pneg %p2605
      $region66: #{tpu_custom_call.1} parent=5 // pred_check_branch
        %2608 = sbr.rel (%p2606) target = $region68
      $region67: #{tpu_custom_call.1} parent=5 // pred_region
        %s2609 = ssub.s32 %s15, 2
      $region68: #{tpu_custom_call.1} parent=5 // pred_fallthru
        _
    $region6: #{tpu_custom_call.1} parent=1 // loop_footer
      %s19 = sadd.s32 1, %s15
    $region7: #{tpu_custom_call.1} parent=1 // loop_footer_branch
      %14 = sbr.rel target = $region3
    $region8: #{tpu_custom_call.1} parent=1 // loop_exit
      _
    %2610 = vsyncpa [#allocation3], 1
    %s2611 = scalar_lea.sflag [#allocation3], 1
    %2612 = vsyncpa %s2611, 1
    %2613 = vsyncpa [#allocation4], 1
    %s2614 = scalar_lea.sflag [#allocation4], 1
    %2615 = vsyncpa %s2614, 1

</llo_original>
